<compile_context>
chip_gen: v6e
topology: v6e:2x2x1
jax: 0.10.0
libtpu: 0.0.40
codegen_flags: <defaults>
</compile_context>

<pallas_src>
import functools

import jax
import jax.numpy as jnp
import numpy as np
from jax.experimental import pallas as pl
from jax.experimental.pallas import tpu as pltpu


def _make_border_masks(H, W):
    """(9, H*W) f32: mask[tap, p] = 1 iff source pixel (h+oh, w+ow) is in bounds."""
    h = np.arange(H)[:, None]
    w = np.arange(W)[None, :]
    masks = []
    for oh in (-1, 0, 1):
        for ow in (-1, 0, 1):
            m = (h + oh >= 0) & (h + oh < H) & (w + ow >= 0) & (w + ow < W)
            masks.append(m.astype(np.float32).reshape(H * W))
    return jnp.asarray(np.stack(masks, axis=0))


def _pick_batch_tile(B, Cin, Cout):
    """Largest images-per-step tile that keeps >= 2 grid steps (v7x: one step per
    TensorCore) and 8-sublane-aligned in/out blocks; else one fat step."""
    best = None
    for bt in range(1, B):                      # bt < B  ->  >= 2 grid steps
        if B % bt == 0 and (bt * Cin) % 8 == 0 and (bt * Cout) % 8 == 0:
            best = bt
    return best if best is not None else B      # block == full array: always legal


def _stage(x, w_ref, masks_ref, col_ref, *, H, W):
    """3x3 SAME conv (+bias) + InstanceNorm2d(affine=False) + tanh.

    x         : (Cin, H*W) f32 value (spatial flattened on the lane axis)
    w_ref     : (Cout, 9*Cin + 1) VMEM ref; column tap*Cin + cin holds
                torch_w[cout, cin, kh, kw] with tap = kh*3 + kw, last col = bias.
    masks_ref : (9, H*W) VMEM ref of border masks (zero padding realization)
    col_ref   : (9*Cin + 1, H*W) VMEM scratch (im2col); last row pre-set to 1.
    returns (Cout, H*W) f32
    """
    HW = H * W
    cin = x.shape[0]

    # Build the im2col RHS with XLU lane rolls + border masks (no jnp.pad).
    for tap in range(9):
        oh, ow = tap // 3 - 1, tap % 3 - 1
        s = oh * W + ow                                   # flat source offset
        # output[p] needs x[p + s]: circular lane roll, borders masked below.
        shifted = x if s == 0 else pltpu.roll(x, shift=(-s) % HW, axis=1)
        if oh != 0 or ow != 0:
            shifted = shifted * masks_ref[tap:tap + 1, :]
        col_ref[tap * cin:(tap + 1) * cin, :] = shifted

    # ONE deep MXU matmul: (Cout, 9*Cin+1) @ (9*Cin+1, H*W); bias via ones row.
    y = jnp.dot(w_ref[...], col_ref[...], preferred_element_type=jnp.float32)

    # InstanceNorm2d (eps=1e-5, biased variance) over the spatial (lane) axis.
    # Two-pass / centered variance (cancellation-safe), all in f32.
    inv_hw = 1.0 / HW
    mean = jnp.sum(y, axis=1, keepdims=True) * inv_hw
    c = y - mean
    var = jnp.sum(c * c, axis=1, keepdims=True) * inv_hw
    return jnp.tanh(c * jax.lax.rsqrt(var + 1e-5))


def _double_conv_kernel(x_ref, masks_ref, w1_ref, w2_ref, o_ref,
                        col1_ref, col2_ref, *, H, W, Bt, Cin, Cmid, Cout):
    HW = H * W
    # Ones rows matching the folded-in bias columns (written once per step).
    col1_ref[9 * Cin:9 * Cin + 1, :] = jnp.ones((1, HW), jnp.float32)
    col2_ref[9 * Cmid:9 * Cmid + 1, :] = jnp.ones((1, HW), jnp.float32)

    for bt in range(Bt):                                   # Bt images per grid step
        x = x_ref[bt * Cin:(bt + 1) * Cin, :]              # (Cin,  H*W)
        y1 = _stage(x, w1_ref, masks_ref, col1_ref, H=H, W=W)   # (Cmid, H*W), on-chip
        y2 = _stage(y1, w2_ref, masks_ref, col2_ref, H=H, W=W)  # (Cout, H*W)
        o_ref[bt * Cout:(bt + 1) * Cout, :] = y2


def double_conv(x_nchw, params, *, batch_tile=None):
    """Forward pass of DoubleConv. Input/output in PyTorch NCHW layout."""
    B, Cin, H, W = x_nchw.shape
    HW = H * W
    Cmid, K1 = params["w1"].shape
    Cout, K2 = params["w2"].shape
    assert K1 == 9 * Cin + 1 and K2 == 9 * Cmid + 1

    Bt = batch_tile if batch_tile is not None else _pick_batch_tile(B, Cin, Cout)
    assert B % Bt == 0
    G = B // Bt

    # NCHW -> (B*Cin, H*W): sublane = batch*channel, lane = flattened spatial
    # (a pure reshape — no transposes needed on either side).
    x2d = x_nchw.reshape(B * Cin, HW)
    masks = _make_border_masks(H, W)

    flops = 2 * B * HW * 9 * (Cin * Cmid + Cmid * Cout)
    transcendentals = B * HW * (Cmid + Cout)               # tanh
    bytes_accessed = 4 * (x2d.size + B * Cout * HW
                          + params["w1"].size + params["w2"].size + masks.size)

    out = pl.pallas_call(
        functools.partial(_double_conv_kernel, H=H, W=W, Bt=Bt,
                          Cin=Cin, Cmid=Cmid, Cout=Cout),
        out_shape=jax.ShapeDtypeStruct((B * Cout, HW), jnp.float32),
        grid=(G,),
        in_specs=[
            pl.BlockSpec((Bt * Cin, HW), lambda g: (g, 0)),
            pl.BlockSpec((9, HW), lambda g: (0, 0)),
            pl.BlockSpec((Cmid, K1), lambda g: (0, 0)),
            pl.BlockSpec((Cout, K2), lambda g: (0, 0)),
        ],
        out_specs=pl.BlockSpec((Bt * Cout, HW), lambda g: (g, 0)),
        scratch_shapes=[
            pltpu.VMEM((K1, HW), jnp.float32),              # stage-1 im2col
            pltpu.VMEM((K2, HW), jnp.float32),              # stage-2 im2col
        ],
        compiler_params=pltpu.CompilerParams(
            dimension_semantics=("parallel",),              # >=2 steps -> both v7x TCs
        ),
        cost_estimate=pl.CostEstimate(flops=int(flops),
                                      transcendentals=int(transcendentals),
                                      bytes_accessed=int(bytes_accessed)),
    )(x2d, masks, params["w1"], params["w2"])
    return out.reshape(B, Cout, H, W)


def init_params(key, in_channels, out_channels, mid_channels=None):
    if not mid_channels:
        mid_channels = out_channels
    k1, k2, k3, k4 = jax.random.split(key, 4)
    # PyTorch Conv2d weight layout (Cout, Cin, 3, 3)
    w1_t = 0.1 * jax.random.normal(k1, (mid_channels, in_channels, 3, 3), jnp.float32)
    w2_t = 0.1 * jax.random.normal(k2, (out_channels, mid_channels, 3, 3), jnp.float32)
    b1 = 0.1 * jax.random.normal(k3, (mid_channels,), jnp.float32)
    b2 = 0.1 * jax.random.normal(k4, (out_channels,), jnp.float32)

    def pack(w_t, b):
        cout, cin = w_t.shape[0], w_t.shape[1]
        # (Cout,Cin,kh,kw) -> (Cout,kh,kw,Cin) -> (Cout, 9*Cin): column tap*Cin+cin;
        # bias appended as one extra column (matched by the ones row in the im2col).
        w_flat = jnp.transpose(w_t, (0, 2, 3, 1)).reshape(cout, 9 * cin)
        return jnp.concatenate([w_flat, b[:, None]], axis=1)

    return {
        "w1": pack(w1_t, b1), "w2": pack(w2_t, b2),
        "_w1_torch": w1_t, "_b1": b1, "_w2_torch": w2_t, "_b2": b2,
    }


def _reference(x_nchw, params):
    """Pure-JAX reference (NCHW conv + instance norm + tanh) for validation."""
    def stage(x, w_torch, b):
        y = jax.lax.conv_general_dilated(
            x, w_torch, window_strides=(1, 1), padding="SAME",
            dimension_numbers=("NCHW", "OIHW", "NCHW"),
            precision=jax.lax.Precision.HIGHEST)
        y = y + b[None, :, None, None]
        mean = jnp.mean(y, axis=(2, 3), keepdims=True)
        var = jnp.mean((y - mean) ** 2, axis=(2, 3), keepdims=True)
        return jnp.tanh((y - mean) * jax.lax.rsqrt(var + 1e-5))

    y = stage(x_nchw, params["_w1_torch"], params["_b1"])
    return stage(y, params["_w2_torch"], params["_b2"])


if __name__ == "__main__":
    key = jax.random.PRNGKey(0)
    kx, kp = jax.random.split(key)

    # B=4 -> batch tile of 2 images/step (full (8,256) in/out slabs) AND
    # 2 grid steps for the "parallel" batch axis (both v7x TensorCores).
    B, C_in, H, W = 4, 4, 16, 16
    C_mid, C_out = 8, 4

    x = jax.random.normal(kx, (B, C_in, H, W), jnp.float32)   # NCHW, like PyTorch
    params = init_params(kp, C_in, C_out, C_mid)

    out = jax.block_until_ready(double_conv(x, params))
    ref = jax.block_until_ready(_reference(x, params))

    assert out.shape == (B, C_out, H, W), out.shape
    np.testing.assert_allclose(np.asarray(out), np.asarray(ref), atol=1e-4, rtol=1e-4)
    print("KERNEL_OK")
</pallas_src>

<mosaic_0001>
module attributes {stable_mosaic.version = 11 : i64} {
  func.func @_double_conv_kernel(%arg0: i32, %arg1: memref<8x256xf32, #tpu.memory_space<vmem>>, %arg2: memref<9x256xf32, #tpu.memory_space<vmem>>, %arg3: memref<8x37xf32, #tpu.memory_space<vmem>>, %arg4: memref<4x73xf32, #tpu.memory_space<vmem>>, %arg5: memref<8x256xf32, #tpu.memory_space<vmem>>, %arg6: memref<37x256xf32, #tpu.memory_space<vmem>>, %arg7: memref<73x256xf32, #tpu.memory_space<vmem>>) attributes {dimension_semantics = [#tpu.dimension_semantics<parallel>], iteration_bounds = array<i64: 2>, scalar_prefetch = 0 : i64, scratch_operands = 2 : i64, tpu.core_type = #tpu.core_type<tc>, window_params = [{transform_indices = @transform_0, window_bounds = array<i64: 8, 256>}, {pipeline_mode = #tpu.pipeline_mode<synchronous>, transform_indices = @transform_1, window_bounds = array<i64: 9, 256>}, {pipeline_mode = #tpu.pipeline_mode<synchronous>, transform_indices = @transform_2, window_bounds = array<i64: 8, 37>}, {pipeline_mode = #tpu.pipeline_mode<synchronous>, transform_indices = @transform_3, window_bounds = array<i64: 4, 73>}, {transform_indices = @transform_4, window_bounds = array<i64: 8, 256>}]} {
    %cst = arith.constant 1.000000e+00 : f32
    %0 = vector.broadcast %cst : f32 to vector<1x256xf32>
    %c36 = arith.constant 36 : index
    %c0 = arith.constant 0 : index
    %1 = vector.load %arg6[%c36, %c0] : memref<37x256xf32, #tpu.memory_space<vmem>>, vector<1x256xf32>
    tpu.vector_store %arg6[%c36, %c0], %0 {strides = array<i32>} : memref<37x256xf32, #tpu.memory_space<vmem>>, vector<1x256xf32>,
    %cst_0 = arith.constant 1.000000e+00 : f32
    %2 = vector.broadcast %cst_0 : f32 to vector<1x256xf32>
    %c72 = arith.constant 72 : index
    %c0_1 = arith.constant 0 : index
    %3 = vector.load %arg7[%c72, %c0_1] : memref<73x256xf32, #tpu.memory_space<vmem>>, vector<1x256xf32>
    tpu.vector_store %arg7[%c72, %c0_1], %2 {strides = array<i32>} : memref<73x256xf32, #tpu.memory_space<vmem>>, vector<1x256xf32>,
    %c0_2 = arith.constant 0 : index
    %c0_3 = arith.constant 0 : index
    %4 = vector.load %arg1[%c0_2, %c0_3] : memref<8x256xf32, #tpu.memory_space<vmem>>, vector<4x256xf32>
    %c17_i32 = arith.constant 17 : i32
    %5 = tpu.dynamic_rotate %4 by %c17_i32 dim 1 : vector<4x256xf32>, i32 -> vector<4x256xf32>
    %c0_4 = arith.constant 0 : index
    %c0_5 = arith.constant 0 : index
    %6 = vector.load %arg2[%c0_4, %c0_5] : memref<9x256xf32, #tpu.memory_space<vmem>>, vector<1x256xf32>
    %7 = vector.broadcast %6 : vector<1x256xf32> to vector<4x256xf32>
    %8 = arith.mulf %5, %7 : vector<4x256xf32>
    %c0_6 = arith.constant 0 : index
    %c0_7 = arith.constant 0 : index
    %9 = vector.load %arg6[%c0_6, %c0_7] : memref<37x256xf32, #tpu.memory_space<vmem>>, vector<4x256xf32>
    tpu.vector_store %arg6[%c0_6, %c0_7], %8 {strides = array<i32>} : memref<37x256xf32, #tpu.memory_space<vmem>>, vector<4x256xf32>,
    %c16_i32 = arith.constant 16 : i32
    %10 = tpu.dynamic_rotate %4 by %c16_i32 dim 1 : vector<4x256xf32>, i32 -> vector<4x256xf32>
    %c1 = arith.constant 1 : index
    %c0_8 = arith.constant 0 : index
    %11 = vector.load %arg2[%c1, %c0_8] : memref<9x256xf32, #tpu.memory_space<vmem>>, vector<1x256xf32>
    %12 = vector.broadcast %11 : vector<1x256xf32> to vector<4x256xf32>
    %13 = arith.mulf %10, %12 : vector<4x256xf32>
    %c4 = arith.constant 4 : index
    %c0_9 = arith.constant 0 : index
    %14 = vector.load %arg6[%c4, %c0_9] : memref<37x256xf32, #tpu.memory_space<vmem>>, vector<4x256xf32>
    tpu.vector_store %arg6[%c4, %c0_9], %13 {strides = array<i32>} : memref<37x256xf32, #tpu.memory_space<vmem>>, vector<4x256xf32>,
    %c15_i32 = arith.constant 15 : i32
    %15 = tpu.dynamic_rotate %4 by %c15_i32 dim 1 : vector<4x256xf32>, i32 -> vector<4x256xf32>
    %c2 = arith.constant 2 : index
    %c0_10 = arith.constant 0 : index
    %16 = vector.load %arg2[%c2, %c0_10] : memref<9x256xf32, #tpu.memory_space<vmem>>, vector<1x256xf32>
    %17 = vector.broadcast %16 : vector<1x256xf32> to vector<4x256xf32>
    %18 = arith.mulf %15, %17 : vector<4x256xf32>
    %c8 = arith.constant 8 : index
    %c0_11 = arith.constant 0 : index
    %19 = vector.load %arg6[%c8, %c0_11] : memref<37x256xf32, #tpu.memory_space<vmem>>, vector<4x256xf32>
    tpu.vector_store %arg6[%c8, %c0_11], %18 {strides = array<i32>} : memref<37x256xf32, #tpu.memory_space<vmem>>, vector<4x256xf32>,
    %c1_i32 = arith.constant 1 : i32
    %20 = tpu.dynamic_rotate %4 by %c1_i32 dim 1 : vector<4x256xf32>, i32 -> vector<4x256xf32>
    %c3 = arith.constant 3 : index
    %c0_12 = arith.constant 0 : index
    %21 = vector.load %arg2[%c3, %c0_12] : memref<9x256xf32, #tpu.memory_space<vmem>>, vector<1x256xf32>
    %22 = vector.broadcast %21 : vector<1x256xf32> to vector<4x256xf32>
    %23 = arith.mulf %20, %22 : vector<4x256xf32>
    %c12 = arith.constant 12 : index
    %c0_13 = arith.constant 0 : index
    %24 = vector.load %arg6[%c12, %c0_13] : memref<37x256xf32, #tpu.memory_space<vmem>>, vector<4x256xf32>
    tpu.vector_store %arg6[%c12, %c0_13], %23 {strides = array<i32>} : memref<37x256xf32, #tpu.memory_space<vmem>>, vector<4x256xf32>,
    %c16 = arith.constant 16 : index
    %c0_14 = arith.constant 0 : index
    %25 = vector.load %arg6[%c16, %c0_14] : memref<37x256xf32, #tpu.memory_space<vmem>>, vector<4x256xf32>
    tpu.vector_store %arg6[%c16, %c0_14], %4 {strides = array<i32>} : memref<37x256xf32, #tpu.memory_space<vmem>>, vector<4x256xf32>,
    %c255_i32 = arith.constant 255 : i32
    %26 = tpu.dynamic_rotate %4 by %c255_i32 dim 1 : vector<4x256xf32>, i32 -> vector<4x256xf32>
    %c5 = arith.constant 5 : index
    %c0_15 = arith.constant 0 : index
    %27 = vector.load %arg2[%c5, %c0_15] : memref<9x256xf32, #tpu.memory_space<vmem>>, vector<1x256xf32>
    %28 = vector.broadcast %27 : vector<1x256xf32> to vector<4x256xf32>
    %29 = arith.mulf %26, %28 : vector<4x256xf32>
    %c20 = arith.constant 20 : index
    %c0_16 = arith.constant 0 : index
    %30 = vector.load %arg6[%c20, %c0_16] : memref<37x256xf32, #tpu.memory_space<vmem>>, vector<4x256xf32>
    tpu.vector_store %arg6[%c20, %c0_16], %29 {strides = array<i32>} : memref<37x256xf32, #tpu.memory_space<vmem>>, vector<4x256xf32>,
    %c241_i32 = arith.constant 241 : i32
    %31 = tpu.dynamic_rotate %4 by %c241_i32 dim 1 : vector<4x256xf32>, i32 -> vector<4x256xf32>
    %c6 = arith.constant 6 : index
    %c0_17 = arith.constant 0 : index
    %32 = vector.load %arg2[%c6, %c0_17] : memref<9x256xf32, #tpu.memory_space<vmem>>, vector<1x256xf32>
    %33 = vector.broadcast %32 : vector<1x256xf32> to vector<4x256xf32>
    %34 = arith.mulf %31, %33 : vector<4x256xf32>
    %c24 = arith.constant 24 : index
    %c0_18 = arith.constant 0 : index
    %35 = vector.load %arg6[%c24, %c0_18] : memref<37x256xf32, #tpu.memory_space<vmem>>, vector<4x256xf32>
    tpu.vector_store %arg6[%c24, %c0_18], %34 {strides = array<i32>} : memref<37x256xf32, #tpu.memory_space<vmem>>, vector<4x256xf32>,
    %c240_i32 = arith.constant 240 : i32
    %36 = tpu.dynamic_rotate %4 by %c240_i32 dim 1 : vector<4x256xf32>, i32 -> vector<4x256xf32>
    %c7 = arith.constant 7 : index
    %c0_19 = arith.constant 0 : index
    %37 = vector.load %arg2[%c7, %c0_19] : memref<9x256xf32, #tpu.memory_space<vmem>>, vector<1x256xf32>
    %38 = vector.broadcast %37 : vector<1x256xf32> to vector<4x256xf32>
    %39 = arith.mulf %36, %38 : vector<4x256xf32>
    %c28 = arith.constant 28 : index
    %c0_20 = arith.constant 0 : index
    %40 = vector.load %arg6[%c28, %c0_20] : memref<37x256xf32, #tpu.memory_space<vmem>>, vector<4x256xf32>
    tpu.vector_store %arg6[%c28, %c0_20], %39 {strides = array<i32>} : memref<37x256xf32, #tpu.memory_space<vmem>>, vector<4x256xf32>,
    %c239_i32 = arith.constant 239 : i32
    %41 = tpu.dynamic_rotate %4 by %c239_i32 dim 1 : vector<4x256xf32>, i32 -> vector<4x256xf32>
    %c8_21 = arith.constant 8 : index
    %c0_22 = arith.constant 0 : index
    %42 = vector.load %arg2[%c8_21, %c0_22] : memref<9x256xf32, #tpu.memory_space<vmem>>, vector<1x256xf32>
    %43 = vector.broadcast %42 : vector<1x256xf32> to vector<4x256xf32>
    %44 = arith.mulf %41, %43 : vector<4x256xf32>
    %c32 = arith.constant 32 : index
    %c0_23 = arith.constant 0 : index
    %45 = vector.load %arg6[%c32, %c0_23] : memref<37x256xf32, #tpu.memory_space<vmem>>, vector<4x256xf32>
    tpu.vector_store %arg6[%c32, %c0_23], %44 {strides = array<i32>} : memref<37x256xf32, #tpu.memory_space<vmem>>, vector<4x256xf32>,
    %c0_24 = arith.constant 0 : index
    %c0_25 = arith.constant 0 : index
    %46 = vector.load %arg3[%c0_24, %c0_25] : memref<8x37xf32, #tpu.memory_space<vmem>>, vector<8x37xf32>
    %c0_26 = arith.constant 0 : index
    %c0_27 = arith.constant 0 : index
    %47 = vector.load %arg6[%c0_26, %c0_27] : memref<37x256xf32, #tpu.memory_space<vmem>>, vector<37x256xf32>
    %cst_28 = arith.constant dense<0.000000e+00> : vector<8x256xf32>
    %48 = tpu.matmul %46, %47, %cst_28 {dimension_numbers = #tpu.dot_dimension_numbers<[1], [0], [0], [1], [0, 0, 1, 1], [], []>} : vector<8x37xf32>, vector<37x256xf32>, vector<8x256xf32> -> vector<8x256xf32>
    %cst_29 = arith.constant dense<0.000000e+00> : vector<8xf32>
    %49 = vector.multi_reduction <add>, %48, %cst_29 [1] : vector<8x256xf32> to vector<8xf32>
    %50 = vector.shape_cast %49 : vector<8xf32> to vector<8x1xf32>
    %cst_30 = arith.constant 3.906250e-03 : f32
    %51 = vector.broadcast %cst_30 : f32 to vector<8x1xf32>
    %52 = arith.mulf %50, %51 : vector<8x1xf32>
    %53 = vector.broadcast %52 : vector<8x1xf32> to vector<8x256xf32>
    %54 = arith.subf %48, %53 : vector<8x256xf32>
    %55 = arith.mulf %54, %54 : vector<8x256xf32>
    %cst_31 = arith.constant dense<0.000000e+00> : vector<8xf32>
    %56 = vector.multi_reduction <add>, %55, %cst_31 [1] : vector<8x256xf32> to vector<8xf32>
    %57 = vector.shape_cast %56 : vector<8xf32> to vector<8x1xf32>
    %cst_32 = arith.constant 3.906250e-03 : f32
    %58 = vector.broadcast %cst_32 : f32 to vector<8x1xf32>
    %59 = arith.mulf %57, %58 : vector<8x1xf32>
    %cst_33 = arith.constant 9.99999974E-6 : f32
    %60 = vector.broadcast %cst_33 : f32 to vector<8x1xf32>
    %61 = arith.addf %59, %60 : vector<8x1xf32>
    %62 = math.rsqrt %61 : vector<8x1xf32>
    %63 = vector.broadcast %62 : vector<8x1xf32> to vector<8x256xf32>
    %64 = arith.mulf %54, %63 : vector<8x256xf32>
    %65 = math.tanh %64 : vector<8x256xf32>
    %c17_i32_34 = arith.constant 17 : i32
    %66 = tpu.dynamic_rotate %65 by %c17_i32_34 dim 1 : vector<8x256xf32>, i32 -> vector<8x256xf32>
    %c0_35 = arith.constant 0 : index
    %c0_36 = arith.constant 0 : index
    %67 = vector.load %arg2[%c0_35, %c0_36] : memref<9x256xf32, #tpu.memory_space<vmem>>, vector<1x256xf32>
    %68 = vector.broadcast %67 : vector<1x256xf32> to vector<8x256xf32>
    %69 = arith.mulf %66, %68 : vector<8x256xf32>
    %c0_37 = arith.constant 0 : index
    %c0_38 = arith.constant 0 : index
    %70 = vector.load %arg7[%c0_37, %c0_38] : memref<73x256xf32, #tpu.memory_space<vmem>>, vector<8x256xf32>
    tpu.vector_store %arg7[%c0_37, %c0_38], %69 {strides = array<i32>} : memref<73x256xf32, #tpu.memory_space<vmem>>, vector<8x256xf32>,
    %c16_i32_39 = arith.constant 16 : i32
    %71 = tpu.dynamic_rotate %65 by %c16_i32_39 dim 1 : vector<8x256xf32>, i32 -> vector<8x256xf32>
    %c1_40 = arith.constant 1 : index
    %c0_41 = arith.constant 0 : index
    %72 = vector.load %arg2[%c1_40, %c0_41] : memref<9x256xf32, #tpu.memory_space<vmem>>, vector<1x256xf32>
    %73 = vector.broadcast %72 : vector<1x256xf32> to vector<8x256xf32>
    %74 = arith.mulf %71, %73 : vector<8x256xf32>
    %c8_42 = arith.constant 8 : index
    %c0_43 = arith.constant 0 : index
    %75 = vector.load %arg7[%c8_42, %c0_43] : memref<73x256xf32, #tpu.memory_space<vmem>>, vector<8x256xf32>
    tpu.vector_store %arg7[%c8_42, %c0_43], %74 {strides = array<i32>} : memref<73x256xf32, #tpu.memory_space<vmem>>, vector<8x256xf32>,
    %c15_i32_44 = arith.constant 15 : i32
    %76 = tpu.dynamic_rotate %65 by %c15_i32_44 dim 1 : vector<8x256xf32>, i32 -> vector<8x256xf32>
    %c2_45 = arith.constant 2 : index
    %c0_46 = arith.constant 0 : index
    %77 = vector.load %arg2[%c2_45, %c0_46] : memref<9x256xf32, #tpu.memory_space<vmem>>, vector<1x256xf32>
    %78 = vector.broadcast %77 : vector<1x256xf32> to vector<8x256xf32>
    %79 = arith.mulf %76, %78 : vector<8x256xf32>
    %c16_47 = arith.constant 16 : index
    %c0_48 = arith.constant 0 : index
    %80 = vector.load %arg7[%c16_47, %c0_48] : memref<73x256xf32, #tpu.memory_space<vmem>>, vector<8x256xf32>
    tpu.vector_store %arg7[%c16_47, %c0_48], %79 {strides = array<i32>} : memref<73x256xf32, #tpu.memory_space<vmem>>, vector<8x256xf32>,
    %c1_i32_49 = arith.constant 1 : i32
    %81 = tpu.dynamic_rotate %65 by %c1_i32_49 dim 1 : vector<8x256xf32>, i32 -> vector<8x256xf32>
    %c3_50 = arith.constant 3 : index
    %c0_51 = arith.constant 0 : index
    %82 = vector.load %arg2[%c3_50, %c0_51] : memref<9x256xf32, #tpu.memory_space<vmem>>, vector<1x256xf32>
    %83 = vector.broadcast %82 : vector<1x256xf32> to vector<8x256xf32>
    %84 = arith.mulf %81, %83 : vector<8x256xf32>
    %c24_52 = arith.constant 24 : index
    %c0_53 = arith.constant 0 : index
    %85 = vector.load %arg7[%c24_52, %c0_53] : memref<73x256xf32, #tpu.memory_space<vmem>>, vector<8x256xf32>
    tpu.vector_store %arg7[%c24_52, %c0_53], %84 {strides = array<i32>} : memref<73x256xf32, #tpu.memory_space<vmem>>, vector<8x256xf32>,
    %c32_54 = arith.constant 32 : index
    %c0_55 = arith.constant 0 : index
    %86 = vector.load %arg7[%c32_54, %c0_55] : memref<73x256xf32, #tpu.memory_space<vmem>>, vector<8x256xf32>
    tpu.vector_store %arg7[%c32_54, %c0_55], %65 {strides = array<i32>} : memref<73x256xf32, #tpu.memory_space<vmem>>, vector<8x256xf32>,
    %c255_i32_56 = arith.constant 255 : i32
    %87 = tpu.dynamic_rotate %65 by %c255_i32_56 dim 1 : vector<8x256xf32>, i32 -> vector<8x256xf32>
    %c5_57 = arith.constant 5 : index
    %c0_58 = arith.constant 0 : index
    %88 = vector.load %arg2[%c5_57, %c0_58] : memref<9x256xf32, #tpu.memory_space<vmem>>, vector<1x256xf32>
    %89 = vector.broadcast %88 : vector<1x256xf32> to vector<8x256xf32>
    %90 = arith.mulf %87, %89 : vector<8x256xf32>
    %c40 = arith.constant 40 : index
    %c0_59 = arith.constant 0 : index
    %91 = vector.load %arg7[%c40, %c0_59] : memref<73x256xf32, #tpu.memory_space<vmem>>, vector<8x256xf32>
    tpu.vector_store %arg7[%c40, %c0_59], %90 {strides = array<i32>} : memref<73x256xf32, #tpu.memory_space<vmem>>, vector<8x256xf32>,
    %c241_i32_60 = arith.constant 241 : i32
    %92 = tpu.dynamic_rotate %65 by %c241_i32_60 dim 1 : vector<8x256xf32>, i32 -> vector<8x256xf32>
    %c6_61 = arith.constant 6 : index
    %c0_62 = arith.constant 0 : index
    %93 = vector.load %arg2[%c6_61, %c0_62] : memref<9x256xf32, #tpu.memory_space<vmem>>, vector<1x256xf32>
    %94 = vector.broadcast %93 : vector<1x256xf32> to vector<8x256xf32>
    %95 = arith.mulf %92, %94 : vector<8x256xf32>
    %c48 = arith.constant 48 : index
    %c0_63 = arith.constant 0 : index
    %96 = vector.load %arg7[%c48, %c0_63] : memref<73x256xf32, #tpu.memory_space<vmem>>, vector<8x256xf32>
    tpu.vector_store %arg7[%c48, %c0_63], %95 {strides = array<i32>} : memref<73x256xf32, #tpu.memory_space<vmem>>, vector<8x256xf32>,
    %c240_i32_64 = arith.constant 240 : i32
    %97 = tpu.dynamic_rotate %65 by %c240_i32_64 dim 1 : vector<8x256xf32>, i32 -> vector<8x256xf32>
    %c7_65 = arith.constant 7 : index
    %c0_66 = arith.constant 0 : index
    %98 = vector.load %arg2[%c7_65, %c0_66] : memref<9x256xf32, #tpu.memory_space<vmem>>, vector<1x256xf32>
    %99 = vector.broadcast %98 : vector<1x256xf32> to vector<8x256xf32>
    %100 = arith.mulf %97, %99 : vector<8x256xf32>
    %c56 = arith.constant 56 : index
    %c0_67 = arith.constant 0 : index
    %101 = vector.load %arg7[%c56, %c0_67] : memref<73x256xf32, #tpu.memory_space<vmem>>, vector<8x256xf32>
    tpu.vector_store %arg7[%c56, %c0_67], %100 {strides = array<i32>} : memref<73x256xf32, #tpu.memory_space<vmem>>, vector<8x256xf32>,
    %c239_i32_68 = arith.constant 239 : i32
    %102 = tpu.dynamic_rotate %65 by %c239_i32_68 dim 1 : vector<8x256xf32>, i32 -> vector<8x256xf32>
    %c8_69 = arith.constant 8 : index
    %c0_70 = arith.constant 0 : index
    %103 = vector.load %arg2[%c8_69, %c0_70] : memref<9x256xf32, #tpu.memory_space<vmem>>, vector<1x256xf32>
    %104 = vector.broadcast %103 : vector<1x256xf32> to vector<8x256xf32>
    %105 = arith.mulf %102, %104 : vector<8x256xf32>
    %c64 = arith.constant 64 : index
    %c0_71 = arith.constant 0 : index
    %106 = vector.load %arg7[%c64, %c0_71] : memref<73x256xf32, #tpu.memory_space<vmem>>, vector<8x256xf32>
    tpu.vector_store %arg7[%c64, %c0_71], %105 {strides = array<i32>} : memref<73x256xf32, #tpu.memory_space<vmem>>, vector<8x256xf32>,
    %c0_72 = arith.constant 0 : index
    %c0_73 = arith.constant 0 : index
    %107 = vector.load %arg4[%c0_72, %c0_73] : memref<4x73xf32, #tpu.memory_space<vmem>>, vector<4x73xf32>
    %c0_74 = arith.constant 0 : index
    %c0_75 = arith.constant 0 : index
    %108 = vector.load %arg7[%c0_74, %c0_75] : memref<73x256xf32, #tpu.memory_space<vmem>>, vector<73x256xf32>
    %cst_76 = arith.constant dense<0.000000e+00> : vector<4x256xf32>
    %109 = tpu.matmul %107, %108, %cst_76 {dimension_numbers = #tpu.dot_dimension_numbers<[1], [0], [0], [1], [0, 0, 1, 1], [], []>} : vector<4x73xf32>, vector<73x256xf32>, vector<4x256xf32> -> vector<4x256xf32>
    %cst_77 = arith.constant dense<0.000000e+00> : vector<4xf32>
    %110 = vector.multi_reduction <add>, %109, %cst_77 [1] : vector<4x256xf32> to vector<4xf32>
    %111 = vector.shape_cast %110 : vector<4xf32> to vector<4x1xf32>
    %cst_78 = arith.constant 3.906250e-03 : f32
    %112 = vector.broadcast %cst_78 : f32 to vector<4x1xf32>
    %113 = arith.mulf %111, %112 : vector<4x1xf32>
    %114 = vector.broadcast %113 : vector<4x1xf32> to vector<4x256xf32>
    %115 = arith.subf %109, %114 : vector<4x256xf32>
    %116 = arith.mulf %115, %115 : vector<4x256xf32>
    %cst_79 = arith.constant dense<0.000000e+00> : vector<4xf32>
    %117 = vector.multi_reduction <add>, %116, %cst_79 [1] : vector<4x256xf32> to vector<4xf32>
    %118 = vector.shape_cast %117 : vector<4xf32> to vector<4x1xf32>
    %cst_80 = arith.constant 3.906250e-03 : f32
    %119 = vector.broadcast %cst_80 : f32 to vector<4x1xf32>
    %120 = arith.mulf %118, %119 : vector<4x1xf32>
    %cst_81 = arith.constant 9.99999974E-6 : f32
    %121 = vector.broadcast %cst_81 : f32 to vector<4x1xf32>
    %122 = arith.addf %120, %121 : vector<4x1xf32>
    %123 = math.rsqrt %122 : vector<4x1xf32>
    %124 = vector.broadcast %123 : vector<4x1xf32> to vector<4x256xf32>
    %125 = arith.mulf %115, %124 : vector<4x256xf32>
    %126 = math.tanh %125 : vector<4x256xf32>
    %c0_82 = arith.constant 0 : index
    %c0_83 = arith.constant 0 : index
    %127 = vector.load %arg5[%c0_82, %c0_83] : memref<8x256xf32, #tpu.memory_space<vmem>>, vector<4x256xf32>
    tpu.vector_store %arg5[%c0_82, %c0_83], %126 {strides = array<i32>} : memref<8x256xf32, #tpu.memory_space<vmem>>, vector<4x256xf32>,
    %c4_84 = arith.constant 4 : index
    %c0_85 = arith.constant 0 : index
    %128 = vector.load %arg1[%c4_84, %c0_85] : memref<8x256xf32, #tpu.memory_space<vmem>>, vector<4x256xf32>
    %c17_i32_86 = arith.constant 17 : i32
    %129 = tpu.dynamic_rotate %128 by %c17_i32_86 dim 1 : vector<4x256xf32>, i32 -> vector<4x256xf32>
    %c0_87 = arith.constant 0 : index
    %c0_88 = arith.constant 0 : index
    %130 = vector.load %arg2[%c0_87, %c0_88] : memref<9x256xf32, #tpu.memory_space<vmem>>, vector<1x256xf32>
    %131 = vector.broadcast %130 : vector<1x256xf32> to vector<4x256xf32>
    %132 = arith.mulf %129, %131 : vector<4x256xf32>
    %c0_89 = arith.constant 0 : index
    %c0_90 = arith.constant 0 : index
    %133 = vector.load %arg6[%c0_89, %c0_90] : memref<37x256xf32, #tpu.memory_space<vmem>>, vector<4x256xf32>
    tpu.vector_store %arg6[%c0_89, %c0_90], %132 {strides = array<i32>} : memref<37x256xf32, #tpu.memory_space<vmem>>, vector<4x256xf32>,
    %c16_i32_91 = arith.constant 16 : i32
    %134 = tpu.dynamic_rotate %128 by %c16_i32_91 dim 1 : vector<4x256xf32>, i32 -> vector<4x256xf32>
    %c1_92 = arith.constant 1 : index
    %c0_93 = arith.constant 0 : index
    %135 = vector.load %arg2[%c1_92, %c0_93] : memref<9x256xf32, #tpu.memory_space<vmem>>, vector<1x256xf32>
    %136 = vector.broadcast %135 : vector<1x256xf32> to vector<4x256xf32>
    %137 = arith.mulf %134, %136 : vector<4x256xf32>
    %c4_94 = arith.constant 4 : index
    %c0_95 = arith.constant 0 : index
    %138 = vector.load %arg6[%c4_94, %c0_95] : memref<37x256xf32, #tpu.memory_space<vmem>>, vector<4x256xf32>
    tpu.vector_store %arg6[%c4_94, %c0_95], %137 {strides = array<i32>} : memref<37x256xf32, #tpu.memory_space<vmem>>, vector<4x256xf32>,
    %c15_i32_96 = arith.constant 15 : i32
    %139 = tpu.dynamic_rotate %128 by %c15_i32_96 dim 1 : vector<4x256xf32>, i32 -> vector<4x256xf32>
    %c2_97 = arith.constant 2 : index
    %c0_98 = arith.constant 0 : index
    %140 = vector.load %arg2[%c2_97, %c0_98] : memref<9x256xf32, #tpu.memory_space<vmem>>, vector<1x256xf32>
    %141 = vector.broadcast %140 : vector<1x256xf32> to vector<4x256xf32>
    %142 = arith.mulf %139, %141 : vector<4x256xf32>
    %c8_99 = arith.constant 8 : index
    %c0_100 = arith.constant 0 : index
    %143 = vector.load %arg6[%c8_99, %c0_100] : memref<37x256xf32, #tpu.memory_space<vmem>>, vector<4x256xf32>
    tpu.vector_store %arg6[%c8_99, %c0_100], %142 {strides = array<i32>} : memref<37x256xf32, #tpu.memory_space<vmem>>, vector<4x256xf32>,
    %c1_i32_101 = arith.constant 1 : i32
    %144 = tpu.dynamic_rotate %128 by %c1_i32_101 dim 1 : vector<4x256xf32>, i32 -> vector<4x256xf32>
    %c3_102 = arith.constant 3 : index
    %c0_103 = arith.constant 0 : index
    %145 = vector.load %arg2[%c3_102, %c0_103] : memref<9x256xf32, #tpu.memory_space<vmem>>, vector<1x256xf32>
    %146 = vector.broadcast %145 : vector<1x256xf32> to vector<4x256xf32>
    %147 = arith.mulf %144, %146 : vector<4x256xf32>
    %c12_104 = arith.constant 12 : index
    %c0_105 = arith.constant 0 : index
    %148 = vector.load %arg6[%c12_104, %c0_105] : memref<37x256xf32, #tpu.memory_space<vmem>>, vector<4x256xf32>
    tpu.vector_store %arg6[%c12_104, %c0_105], %147 {strides = array<i32>} : memref<37x256xf32, #tpu.memory_space<vmem>>, vector<4x256xf32>,
    %c16_106 = arith.constant 16 : index
    %c0_107 = arith.constant 0 : index
    %149 = vector.load %arg6[%c16_106, %c0_107] : memref<37x256xf32, #tpu.memory_space<vmem>>, vector<4x256xf32>
    tpu.vector_store %arg6[%c16_106, %c0_107], %128 {strides = array<i32>} : memref<37x256xf32, #tpu.memory_space<vmem>>, vector<4x256xf32>,
    %c255_i32_108 = arith.constant 255 : i32
    %150 = tpu.dynamic_rotate %128 by %c255_i32_108 dim 1 : vector<4x256xf32>, i32 -> vector<4x256xf32>
    %c5_109 = arith.constant 5 : index
    %c0_110 = arith.constant 0 : index
    %151 = vector.load %arg2[%c5_109, %c0_110] : memref<9x256xf32, #tpu.memory_space<vmem>>, vector<1x256xf32>
    %152 = vector.broadcast %151 : vector<1x256xf32> to vector<4x256xf32>
    %153 = arith.mulf %150, %152 : vector<4x256xf32>
    %c20_111 = arith.constant 20 : index
    %c0_112 = arith.constant 0 : index
    %154 = vector.load %arg6[%c20_111, %c0_112] : memref<37x256xf32, #tpu.memory_space<vmem>>, vector<4x256xf32>
    tpu.vector_store %arg6[%c20_111, %c0_112], %153 {strides = array<i32>} : memref<37x256xf32, #tpu.memory_space<vmem>>, vector<4x256xf32>,
    %c241_i32_113 = arith.constant 241 : i32
    %155 = tpu.dynamic_rotate %128 by %c241_i32_113 dim 1 : vector<4x256xf32>, i32 -> vector<4x256xf32>
    %c6_114 = arith.constant 6 : index
    %c0_115 = arith.constant 0 : index
    %156 = vector.load %arg2[%c6_114, %c0_115] : memref<9x256xf32, #tpu.memory_space<vmem>>, vector<1x256xf32>
    %157 = vector.broadcast %156 : vector<1x256xf32> to vector<4x256xf32>
    %158 = arith.mulf %155, %157 : vector<4x256xf32>
    %c24_116 = arith.constant 24 : index
    %c0_117 = arith.constant 0 : index
    %159 = vector.load %arg6[%c24_116, %c0_117] : memref<37x256xf32, #tpu.memory_space<vmem>>, vector<4x256xf32>
    tpu.vector_store %arg6[%c24_116, %c0_117], %158 {strides = array<i32>} : memref<37x256xf32, #tpu.memory_space<vmem>>, vector<4x256xf32>,
    %c240_i32_118 = arith.constant 240 : i32
    %160 = tpu.dynamic_rotate %128 by %c240_i32_118 dim 1 : vector<4x256xf32>, i32 -> vector<4x256xf32>
    %c7_119 = arith.constant 7 : index
    %c0_120 = arith.constant 0 : index
    %161 = vector.load %arg2[%c7_119, %c0_120] : memref<9x256xf32, #tpu.memory_space<vmem>>, vector<1x256xf32>
    %162 = vector.broadcast %161 : vector<1x256xf32> to vector<4x256xf32>
    %163 = arith.mulf %160, %162 : vector<4x256xf32>
    %c28_121 = arith.constant 28 : index
    %c0_122 = arith.constant 0 : index
    %164 = vector.load %arg6[%c28_121, %c0_122] : memref<37x256xf32, #tpu.memory_space<vmem>>, vector<4x256xf32>
    tpu.vector_store %arg6[%c28_121, %c0_122], %163 {strides = array<i32>} : memref<37x256xf32, #tpu.memory_space<vmem>>, vector<4x256xf32>,
    %c239_i32_123 = arith.constant 239 : i32
    %165 = tpu.dynamic_rotate %128 by %c239_i32_123 dim 1 : vector<4x256xf32>, i32 -> vector<4x256xf32>
    %c8_124 = arith.constant 8 : index
    %c0_125 = arith.constant 0 : index
    %166 = vector.load %arg2[%c8_124, %c0_125] : memref<9x256xf32, #tpu.memory_space<vmem>>, vector<1x256xf32>
    %167 = vector.broadcast %166 : vector<1x256xf32> to vector<4x256xf32>
    %168 = arith.mulf %165, %167 : vector<4x256xf32>
    %c32_126 = arith.constant 32 : index
    %c0_127 = arith.constant 0 : index
    %169 = vector.load %arg6[%c32_126, %c0_127] : memref<37x256xf32, #tpu.memory_space<vmem>>, vector<4x256xf32>
    tpu.vector_store %arg6[%c32_126, %c0_127], %168 {strides = array<i32>} : memref<37x256xf32, #tpu.memory_space<vmem>>, vector<4x256xf32>,
    %c0_128 = arith.constant 0 : index
    %c0_129 = arith.constant 0 : index
    %170 = vector.load %arg3[%c0_128, %c0_129] : memref<8x37xf32, #tpu.memory_space<vmem>>, vector<8x37xf32>
    %c0_130 = arith.constant 0 : index
    %c0_131 = arith.constant 0 : index
    %171 = vector.load %arg6[%c0_130, %c0_131] : memref<37x256xf32, #tpu.memory_space<vmem>>, vector<37x256xf32>
    %cst_132 = arith.constant dense<0.000000e+00> : vector<8x256xf32>
    %172 = tpu.matmul %170, %171, %cst_132 {dimension_numbers = #tpu.dot_dimension_numbers<[1], [0], [0], [1], [0, 0, 1, 1], [], []>} : vector<8x37xf32>, vector<37x256xf32>, vector<8x256xf32> -> vector<8x256xf32>
    %cst_133 = arith.constant dense<0.000000e+00> : vector<8xf32>
    %173 = vector.multi_reduction <add>, %172, %cst_133 [1] : vector<8x256xf32> to vector<8xf32>
    %174 = vector.shape_cast %173 : vector<8xf32> to vector<8x1xf32>
    %cst_134 = arith.constant 3.906250e-03 : f32
    %175 = vector.broadcast %cst_134 : f32 to vector<8x1xf32>
    %176 = arith.mulf %174, %175 : vector<8x1xf32>
    %177 = vector.broadcast %176 : vector<8x1xf32> to vector<8x256xf32>
    %178 = arith.subf %172, %177 : vector<8x256xf32>
    %179 = arith.mulf %178, %178 : vector<8x256xf32>
    %cst_135 = arith.constant dense<0.000000e+00> : vector<8xf32>
    %180 = vector.multi_reduction <add>, %179, %cst_135 [1] : vector<8x256xf32> to vector<8xf32>
    %181 = vector.shape_cast %180 : vector<8xf32> to vector<8x1xf32>
    %cst_136 = arith.constant 3.906250e-03 : f32
    %182 = vector.broadcast %cst_136 : f32 to vector<8x1xf32>
    %183 = arith.mulf %181, %182 : vector<8x1xf32>
    %cst_137 = arith.constant 9.99999974E-6 : f32
    %184 = vector.broadcast %cst_137 : f32 to vector<8x1xf32>
    %185 = arith.addf %183, %184 : vector<8x1xf32>
    %186 = math.rsqrt %185 : vector<8x1xf32>
    %187 = vector.broadcast %186 : vector<8x1xf32> to vector<8x256xf32>
    %188 = arith.mulf %178, %187 : vector<8x256xf32>
    %189 = math.tanh %188 : vector<8x256xf32>
    %c17_i32_138 = arith.constant 17 : i32
    %190 = tpu.dynamic_rotate %189 by %c17_i32_138 dim 1 : vector<8x256xf32>, i32 -> vector<8x256xf32>
    %c0_139 = arith.constant 0 : index
    %c0_140 = arith.constant 0 : index
    %191 = vector.load %arg2[%c0_139, %c0_140] : memref<9x256xf32, #tpu.memory_space<vmem>>, vector<1x256xf32>
    %192 = vector.broadcast %191 : vector<1x256xf32> to vector<8x256xf32>
    %193 = arith.mulf %190, %192 : vector<8x256xf32>
    %c0_141 = arith.constant 0 : index
    %c0_142 = arith.constant 0 : index
    %194 = vector.load %arg7[%c0_141, %c0_142] : memref<73x256xf32, #tpu.memory_space<vmem>>, vector<8x256xf32>
    tpu.vector_store %arg7[%c0_141, %c0_142], %193 {strides = array<i32>} : memref<73x256xf32, #tpu.memory_space<vmem>>, vector<8x256xf32>,
    %c16_i32_143 = arith.constant 16 : i32
    %195 = tpu.dynamic_rotate %189 by %c16_i32_143 dim 1 : vector<8x256xf32>, i32 -> vector<8x256xf32>
    %c1_144 = arith.constant 1 : index
    %c0_145 = arith.constant 0 : index
    %196 = vector.load %arg2[%c1_144, %c0_145] : memref<9x256xf32, #tpu.memory_space<vmem>>, vector<1x256xf32>
    %197 = vector.broadcast %196 : vector<1x256xf32> to vector<8x256xf32>
    %198 = arith.mulf %195, %197 : vector<8x256xf32>
    %c8_146 = arith.constant 8 : index
    %c0_147 = arith.constant 0 : index
    %199 = vector.load %arg7[%c8_146, %c0_147] : memref<73x256xf32, #tpu.memory_space<vmem>>, vector<8x256xf32>
    tpu.vector_store %arg7[%c8_146, %c0_147], %198 {strides = array<i32>} : memref<73x256xf32, #tpu.memory_space<vmem>>, vector<8x256xf32>,
    %c15_i32_148 = arith.constant 15 : i32
    %200 = tpu.dynamic_rotate %189 by %c15_i32_148 dim 1 : vector<8x256xf32>, i32 -> vector<8x256xf32>
    %c2_149 = arith.constant 2 : index
    %c0_150 = arith.constant 0 : index
    %201 = vector.load %arg2[%c2_149, %c0_150] : memref<9x256xf32, #tpu.memory_space<vmem>>, vector<1x256xf32>
    %202 = vector.broadcast %201 : vector<1x256xf32> to vector<8x256xf32>
    %203 = arith.mulf %200, %202 : vector<8x256xf32>
    %c16_151 = arith.constant 16 : index
    %c0_152 = arith.constant 0 : index
    %204 = vector.load %arg7[%c16_151, %c0_152] : memref<73x256xf32, #tpu.memory_space<vmem>>, vector<8x256xf32>
    tpu.vector_store %arg7[%c16_151, %c0_152], %203 {strides = array<i32>} : memref<73x256xf32, #tpu.memory_space<vmem>>, vector<8x256xf32>,
    %c1_i32_153 = arith.constant 1 : i32
    %205 = tpu.dynamic_rotate %189 by %c1_i32_153 dim 1 : vector<8x256xf32>, i32 -> vector<8x256xf32>
    %c3_154 = arith.constant 3 : index
    %c0_155 = arith.constant 0 : index
    %206 = vector.load %arg2[%c3_154, %c0_155] : memref<9x256xf32, #tpu.memory_space<vmem>>, vector<1x256xf32>
    %207 = vector.broadcast %206 : vector<1x256xf32> to vector<8x256xf32>
    %208 = arith.mulf %205, %207 : vector<8x256xf32>
    %c24_156 = arith.constant 24 : index
    %c0_157 = arith.constant 0 : index
    %209 = vector.load %arg7[%c24_156, %c0_157] : memref<73x256xf32, #tpu.memory_space<vmem>>, vector<8x256xf32>
    tpu.vector_store %arg7[%c24_156, %c0_157], %208 {strides = array<i32>} : memref<73x256xf32, #tpu.memory_space<vmem>>, vector<8x256xf32>,
    %c32_158 = arith.constant 32 : index
    %c0_159 = arith.constant 0 : index
    %210 = vector.load %arg7[%c32_158, %c0_159] : memref<73x256xf32, #tpu.memory_space<vmem>>, vector<8x256xf32>
    tpu.vector_store %arg7[%c32_158, %c0_159], %189 {strides = array<i32>} : memref<73x256xf32, #tpu.memory_space<vmem>>, vector<8x256xf32>,
    %c255_i32_160 = arith.constant 255 : i32
    %211 = tpu.dynamic_rotate %189 by %c255_i32_160 dim 1 : vector<8x256xf32>, i32 -> vector<8x256xf32>
    %c5_161 = arith.constant 5 : index
    %c0_162 = arith.constant 0 : index
    %212 = vector.load %arg2[%c5_161, %c0_162] : memref<9x256xf32, #tpu.memory_space<vmem>>, vector<1x256xf32>
    %213 = vector.broadcast %212 : vector<1x256xf32> to vector<8x256xf32>
    %214 = arith.mulf %211, %213 : vector<8x256xf32>
    %c40_163 = arith.constant 40 : index
    %c0_164 = arith.constant 0 : index
    %215 = vector.load %arg7[%c40_163, %c0_164] : memref<73x256xf32, #tpu.memory_space<vmem>>, vector<8x256xf32>
    tpu.vector_store %arg7[%c40_163, %c0_164], %214 {strides = array<i32>} : memref<73x256xf32, #tpu.memory_space<vmem>>, vector<8x256xf32>,
    %c241_i32_165 = arith.constant 241 : i32
    %216 = tpu.dynamic_rotate %189 by %c241_i32_165 dim 1 : vector<8x256xf32>, i32 -> vector<8x256xf32>
    %c6_166 = arith.constant 6 : index
    %c0_167 = arith.constant 0 : index
    %217 = vector.load %arg2[%c6_166, %c0_167] : memref<9x256xf32, #tpu.memory_space<vmem>>, vector<1x256xf32>
    %218 = vector.broadcast %217 : vector<1x256xf32> to vector<8x256xf32>
    %219 = arith.mulf %216, %218 : vector<8x256xf32>
    %c48_168 = arith.constant 48 : index
    %c0_169 = arith.constant 0 : index
    %220 = vector.load %arg7[%c48_168, %c0_169] : memref<73x256xf32, #tpu.memory_space<vmem>>, vector<8x256xf32>
    tpu.vector_store %arg7[%c48_168, %c0_169], %219 {strides = array<i32>} : memref<73x256xf32, #tpu.memory_space<vmem>>, vector<8x256xf32>,
    %c240_i32_170 = arith.constant 240 : i32
    %221 = tpu.dynamic_rotate %189 by %c240_i32_170 dim 1 : vector<8x256xf32>, i32 -> vector<8x256xf32>
    %c7_171 = arith.constant 7 : index
    %c0_172 = arith.constant 0 : index
    %222 = vector.load %arg2[%c7_171, %c0_172] : memref<9x256xf32, #tpu.memory_space<vmem>>, vector<1x256xf32>
    %223 = vector.broadcast %222 : vector<1x256xf32> to vector<8x256xf32>
    %224 = arith.mulf %221, %223 : vector<8x256xf32>
    %c56_173 = arith.constant 56 : index
    %c0_174 = arith.constant 0 : index
    %225 = vector.load %arg7[%c56_173, %c0_174] : memref<73x256xf32, #tpu.memory_space<vmem>>, vector<8x256xf32>
    tpu.vector_store %arg7[%c56_173, %c0_174], %224 {strides = array<i32>} : memref<73x256xf32, #tpu.memory_space<vmem>>, vector<8x256xf32>,
    %c239_i32_175 = arith.constant 239 : i32
    %226 = tpu.dynamic_rotate %189 by %c239_i32_175 dim 1 : vector<8x256xf32>, i32 -> vector<8x256xf32>
    %c8_176 = arith.constant 8 : index
    %c0_177 = arith.constant 0 : index
    %227 = vector.load %arg2[%c8_176, %c0_177] : memref<9x256xf32, #tpu.memory_space<vmem>>, vector<1x256xf32>
    %228 = vector.broadcast %227 : vector<1x256xf32> to vector<8x256xf32>
    %229 = arith.mulf %226, %228 : vector<8x256xf32>
    %c64_178 = arith.constant 64 : index
    %c0_179 = arith.constant 0 : index
    %230 = vector.load %arg7[%c64_178, %c0_179] : memref<73x256xf32, #tpu.memory_space<vmem>>, vector<8x256xf32>
    tpu.vector_store %arg7[%c64_178, %c0_179], %229 {strides = array<i32>} : memref<73x256xf32, #tpu.memory_space<vmem>>, vector<8x256xf32>,
    %c0_180 = arith.constant 0 : index
    %c0_181 = arith.constant 0 : index
    %231 = vector.load %arg4[%c0_180, %c0_181] : memref<4x73xf32, #tpu.memory_space<vmem>>, vector<4x73xf32>
    %c0_182 = arith.constant 0 : index
    %c0_183 = arith.constant 0 : index
    %232 = vector.load %arg7[%c0_182, %c0_183] : memref<73x256xf32, #tpu.memory_space<vmem>>, vector<73x256xf32>
    %cst_184 = arith.constant dense<0.000000e+00> : vector<4x256xf32>
    %233 = tpu.matmul %231, %232, %cst_184 {dimension_numbers = #tpu.dot_dimension_numbers<[1], [0], [0], [1], [0, 0, 1, 1], [], []>} : vector<4x73xf32>, vector<73x256xf32>, vector<4x256xf32> -> vector<4x256xf32>
    %cst_185 = arith.constant dense<0.000000e+00> : vector<4xf32>
    %234 = vector.multi_reduction <add>, %233, %cst_185 [1] : vector<4x256xf32> to vector<4xf32>
    %235 = vector.shape_cast %234 : vector<4xf32> to vector<4x1xf32>
    %cst_186 = arith.constant 3.906250e-03 : f32
    %236 = vector.broadcast %cst_186 : f32 to vector<4x1xf32>
    %237 = arith.mulf %235, %236 : vector<4x1xf32>
    %238 = vector.broadcast %237 : vector<4x1xf32> to vector<4x256xf32>
    %239 = arith.subf %233, %238 : vector<4x256xf32>
    %240 = arith.mulf %239, %239 : vector<4x256xf32>
    %cst_187 = arith.constant dense<0.000000e+00> : vector<4xf32>
    %241 = vector.multi_reduction <add>, %240, %cst_187 [1] : vector<4x256xf32> to vector<4xf32>
    %242 = vector.shape_cast %241 : vector<4xf32> to vector<4x1xf32>
    %cst_188 = arith.constant 3.906250e-03 : f32
    %243 = vector.broadcast %cst_188 : f32 to vector<4x1xf32>
    %244 = arith.mulf %242, %243 : vector<4x1xf32>
    %cst_189 = arith.constant 9.99999974E-6 : f32
    %245 = vector.broadcast %cst_189 : f32 to vector<4x1xf32>
    %246 = arith.addf %244, %245 : vector<4x1xf32>
    %247 = math.rsqrt %246 : vector<4x1xf32>
    %248 = vector.broadcast %247 : vector<4x1xf32> to vector<4x256xf32>
    %249 = arith.mulf %239, %248 : vector<4x256xf32>
    %250 = math.tanh %249 : vector<4x256xf32>
    %c4_190 = arith.constant 4 : index
    %c0_191 = arith.constant 0 : index
    %251 = vector.load %arg5[%c4_190, %c0_191] : memref<8x256xf32, #tpu.memory_space<vmem>>, vector<4x256xf32>
    tpu.vector_store %arg5[%c4_190, %c0_191], %250 {strides = array<i32>} : memref<8x256xf32, #tpu.memory_space<vmem>>, vector<4x256xf32>,
    return
  }
  func.func @transform_0(%arg0: i32) -> (i32, i32) {
    %c0_i32 = arith.constant 0 : i32
    %c0_i32_0 = arith.constant 0 : i32
    return %arg0, %c0_i32 : i32, i32
  }
  func.func @transform_1(%arg0: i32) -> (i32, i32) {
    %c0_i32 = arith.constant 0 : i32
    %c0_i32_0 = arith.constant 0 : i32
    %c0_i32_1 = arith.constant 0 : i32
    return %c0_i32, %c0_i32_0 : i32, i32
  }
  func.func @transform_2(%arg0: i32) -> (i32, i32) {
    %c0_i32 = arith.constant 0 : i32
    %c0_i32_0 = arith.constant 0 : i32
    %c0_i32_1 = arith.constant 0 : i32
    return %c0_i32, %c0_i32_0 : i32, i32
  }
  func.func @transform_3(%arg0: i32) -> (i32, i32) {
    %c0_i32 = arith.constant 0 : i32
    %c0_i32_0 = arith.constant 0 : i32
    %c0_i32_1 = arith.constant 0 : i32
    return %c0_i32, %c0_i32_0 : i32, i32
  }
  func.func @transform_4(%arg0: i32) -> (i32, i32) {
    %c0_i32 = arith.constant 0 : i32
    %c0_i32_0 = arith.constant 0 : i32
    return %arg0, %c0_i32 : i32, i32
  }
}

</mosaic_0001>

<llo_original>
// kernel: tpu_custom_call.1
$region0: #{tpu_custom_call.1}
  #allocation0 [shape = 'u32[]', space=smem, size = 0x4, offset = 0x4, fixed_abs, tag = 'smem constant byte address 0x4 - core index']
  #allocation1 [shape = 'u32[144,128]{1,0:T(1,128)}', space=vmem, size = 0x12000, scoped, tag = 'internal scratch']
  #allocation2 [shape = 'f32[37,256]{1,0:T(8,128)}', space=vmem, size = 0xa000, scoped, tag = 'scratch operand']
  #allocation3 [shape = 'f32[73,256]{1,0:T(8,128)}', space=vmem, size = 0x14000, scoped, tag = 'scratch operand']
  %s0 = inlined_call_operand.hbm [shape: f32[16,256], index: 0, kind: input, shape index: {}]
  %s1 = inlined_call_operand.hbm [shape: f32[9,256], index: 1, kind: input, shape index: {}]
  %s2 = inlined_call_operand.hbm [shape: f32[8,37], index: 2, kind: input, shape index: {}]
  %s3 = inlined_call_operand.vmem [shape: f32[4,73], index: 3, kind: input, shape index: {}]
  %s4 = inlined_call_operand.hbm [shape: f32[16,256], index: 4, kind: output, shape index: {}]
  %s5 = sld [smem:[#allocation0]]
  $region61: #{tpu_custom_call.1} parent=0
    _
  %s7 = ssub.s32 1, %s5
  %s8 = scalar_select 0, %s7, %s5
  $region1: #{tpu_custom_call.1} parent=0
    #allocation4 [shape = 'u8[16384]{0}', space=vmem, size = 0x4000, scoped, tag = 'input window, operand 0']
    #allocation5 [shape = 's32[2]{0}', space=sflag, size = 0x8, scoped, tag = 'scoped memory for tpu_custom_call.1']
    #allocation6 [shape = 's32[2]{0}', space=sflag, size = 0x8, scoped, tag = 'scoped memory for tpu_custom_call.1']
    #allocation7 [shape = 'u8[16384]{0}', space=vmem, size = 0x4000, scoped, tag = 'input window, operand 1, single buffered']
    #allocation8 [shape = 's32[1]{0}', space=sflag, size = 0x4, scoped, tag = 'scoped memory for tpu_custom_call.1']
    #allocation9 [shape = 'u8[4096]{0}', space=vmem, size = 0x1000, scoped, tag = 'input window, operand 2, single buffered']
    #allocation10 [shape = 'u8[16384]{0}', space=vmem, size = 0x4000, scoped, tag = 'output window, operand 0']
    %9 = vsyncpa [#allocation5], 0
    %s10 = scalar_lea.sflag [#allocation5], 1
    %11 = vsyncpa %s10, 0
    %12 = vsyncpa [#allocation8], 0
    %13 = vsyncpa [#allocation6], 0
    %s14 = scalar_lea.sflag [#allocation6], 1
    %15 = vsyncpa %s14, 0
    loop: start=0, step=1, limit=4
    $region2: #{tpu_custom_call.1} parent=1 // loop_pre_header
      _
    $region3: #{tpu_custom_call.1} parent=1 // loop_header
      %s17 = sphi 0, %s21
      %p18 = scmp.ge.s32.totalorder %s17, 4
      %s27 = sphi 0, %s29
      %s30 = sphi 0, %s27
      %s31 = sphi 0, %s30
      %s47 = sphi 0, %s31
      %s51 = sphi 0, %s51
      %s53 = sphi 0, %s51
      %s54 = sphi 0, %s53
      %s68 = sphi 0, %s54
      %s72 = sphi 0, %s72
      %s74 = sphi 0, %s72
      %s75 = sphi 0, %s74
      %s89 = sphi 0, %s75
      %s93 = sphi 0, %s93
      %s95 = sphi 0, %s93
      %s96 = sphi 0, %s95
      %s110 = sphi 0, %s96
      %s116 = sphi 0, %s118
      %s119 = sphi 0, %s116
      %s120 = sphi 0, %s119
      %s136 = sphi 0, %s120
    $region4: #{tpu_custom_call.1} parent=1 // loop_header_branch
      %20 = sbr.rel (%p18) target = $region8
    $region5: #{tpu_custom_call.1} parent=1 // loop_body
      %s22 = ssub.s32 %s17, 1
      %s23 = ssub.s32 %s17, 2
      %s24 = sadd.s32 %s17, 1
      %s25 = ssub.s32 %s17, %s24
      %p26 = scmp.eq.s32.totalorder %s25, 0
      %s28 = sadd.s32 %s27, 1
      %s29 = scalar_select %p26, %s27, %s28
      %p32 = pneg %p26
      %p33 = scmp.eq.s32.totalorder %s17, 1
      %p34 = por %p32, %p33
      %p35 = scmp.ne.s32.totalorder %s27, %s30
      %p36 = scmp.eq.s32.totalorder %s17, 0
      %p37 = por %p35, %p36
      %p38 = scmp.ne.s32.totalorder %s27, %s30
      %p39 = scmp.eq.s32.totalorder %s22, 1
      %p40 = por %p38, %p39
      %p41 = scmp.ne.s32.totalorder %s30, %s31
      %p42 = scmp.eq.s32.totalorder %s22, 0
      %p43 = por %p41, %p42
      %p44 = scmp.ne.s32.totalorder %s30, %s31
      %p45 = scmp.eq.s32.totalorder %s23, 1
      %p46 = por %p44, %p45
      %p48 = scmp.ne.s32.totalorder %s31, %s47
      %p49 = scmp.eq.s32.totalorder %s23, 0
      %p50 = por %p48, %p49
      %s52 = sadd.s32 %s51, 1
      %p55 = scmp.eq.s32.totalorder %s17, 1
      %p56 = scmp.ne.s32.totalorder %s51, %s53
      %p57 = scmp.eq.s32.totalorder %s17, 0
      %p58 = por %p56, %p57
      %p59 = scmp.ne.s32.totalorder %s51, %s53
      %p60 = scmp.eq.s32.totalorder %s22, 1
      %p61 = por %p59, %p60
      %p62 = scmp.ne.s32.totalorder %s53, %s54
      %p63 = scmp.eq.s32.totalorder %s22, 0
      %p64 = por %p62, %p63
      %p65 = scmp.ne.s32.totalorder %s53, %s54
      %p66 = scmp.eq.s32.totalorder %s23, 1
      %p67 = por %p65, %p66
      %p69 = scmp.ne.s32.totalorder %s54, %s68
      %p70 = scmp.eq.s32.totalorder %s23, 0
      %p71 = por %p69, %p70
      %s73 = sadd.s32 %s72, 1
      %p76 = scmp.eq.s32.totalorder %s17, 1
      %p77 = scmp.ne.s32.totalorder %s72, %s74
      %p78 = scmp.eq.s32.totalorder %s17, 0
      %p79 = por %p77, %p78
      %p80 = scmp.ne.s32.totalorder %s72, %s74
      %p81 = scmp.eq.s32.totalorder %s22, 1
      %p82 = por %p80, %p81
      %p83 = scmp.ne.s32.totalorder %s74, %s75
      %p84 = scmp.eq.s32.totalorder %s22, 0
      %p85 = por %p83, %p84
      %p86 = scmp.ne.s32.totalorder %s74, %s75
      %p87 = scmp.eq.s32.totalorder %s23, 1
      %p88 = por %p86, %p87
      %p90 = scmp.ne.s32.totalorder %s75, %s89
      %p91 = scmp.eq.s32.totalorder %s23, 0
      %p92 = por %p90, %p91
      %s94 = sadd.s32 %s93, 1
      %p97 = scmp.eq.s32.totalorder %s17, 1
      %p98 = scmp.ne.s32.totalorder %s93, %s95
      %p99 = scmp.eq.s32.totalorder %s17, 0
      %p100 = por %p98, %p99
      %p101 = scmp.ne.s32.totalorder %s93, %s95
      %p102 = scmp.eq.s32.totalorder %s22, 1
      %p103 = por %p101, %p102
      %p104 = scmp.ne.s32.totalorder %s95, %s96
      %p105 = scmp.eq.s32.totalorder %s22, 0
      %p106 = por %p104, %p105
      %p107 = scmp.ne.s32.totalorder %s95, %s96
      %p108 = scmp.eq.s32.totalorder %s23, 1
      %p109 = por %p107, %p108
      %p111 = scmp.ne.s32.totalorder %s96, %s110
      %p112 = scmp.eq.s32.totalorder %s23, 0
      %p113 = por %p111, %p112
      %s114 = ssub.s32 %s17, %s24
      %p115 = scmp.eq.s32.totalorder %s114, 0
      %s117 = sadd.s32 %s116, 1
      %s118 = scalar_select %p115, %s116, %s117
      %p121 = pneg %p115
      %p122 = scmp.eq.s32.totalorder %s17, 1
      %p123 = por %p121, %p122
      %p124 = scmp.ne.s32.totalorder %s116, %s119
      %p125 = scmp.eq.s32.totalorder %s17, 0
      %p126 = por %p124, %p125
      %p127 = scmp.ne.s32.totalorder %s116, %s119
      %p128 = scmp.eq.s32.totalorder %s22, 1
      %p129 = por %p127, %p128
      %p130 = scmp.ne.s32.totalorder %s119, %s120
      %p131 = scmp.eq.s32.totalorder %s22, 0
      %p132 = por %p130, %p131
      %p133 = scmp.ne.s32.totalorder %s119, %s120
      %p134 = scmp.eq.s32.totalorder %s23, 1
      %p135 = por %p133, %p134
      %p137 = scmp.ne.s32.totalorder %s120, %s136
      %p138 = scmp.eq.s32.totalorder %s23, 0
      %p139 = por %p137, %p138
      %p140 = scmp.le.s32.totalorder 1, %s17
      %p141 = scmp.lt.s32.totalorder %s17, 3
      %p142 = pnand %p140, %p141
      %p143 = pneg %p142
      // Predicated region
      $region9: #{tpu_custom_call.1} parent=5 // pred_check
        _
      $region10: #{tpu_custom_call.1} parent=5 // pred_check_branch
        %145 = sbr.rel (%p142) target = $region12
      $region11: #{tpu_custom_call.1} parent=5 // pred_region
        %s146 = ssub.s32 %s17, 1
        // Predicated region
        $region13: #{tpu_custom_call.1} parent=11 // pred_check
          %p147 = pneg %p64
        $region14: #{tpu_custom_call.1} parent=11 // pred_check_branch
          %149 = sbr.rel (%p147) target = $region16
        $region15: #{tpu_custom_call.1} parent=11 // pred_region
          %s151 = ssub.s32 512, 512
          %152 = vsyncadd [#allocation8], %s151
          %s153 = sshll.u32 [#allocation7], 4
          %s154 = int_to_ptr.vmem [resolvable:$true] %s153
          %159 = dma.hbm_to_vmem [thread:$0]  %s1, 512, %s154, [#allocation8], 256, 256, 16
        $region16: #{tpu_custom_call.1} parent=11 // pred_fallthru
          _
        // Predicated region
        $region17: #{tpu_custom_call.1} parent=11 // pred_check
          %p160 = pneg %p85
        $region18: #{tpu_custom_call.1} parent=11 // pred_check_branch
          %162 = sbr.rel (%p160) target = $region20
        $region19: #{tpu_custom_call.1} parent=11 // pred_region
          %s164 = ssub.s32 128, 128
          %165 = vsyncadd [#allocation8], %s164
          %s167 = sshll.u32 [#allocation9], 4
          %s168 = int_to_ptr.vmem [resolvable:$true] %s167
          %170 = dma.hbm_to_vmem [thread:$0]  %s2, 128, %s168, [#allocation8]
        $region20: #{tpu_custom_call.1} parent=11 // pred_fallthru
          _
        // Predicated region
        $region21: #{tpu_custom_call.1} parent=11 // pred_check
          %p171 = pneg %p106
        $region22: #{tpu_custom_call.1} parent=11 // pred_check_branch
          %173 = sbr.rel (%p171) target = $region24
        $region23: #{tpu_custom_call.1} parent=11 // pred_region
          _
        $region24: #{tpu_custom_call.1} parent=11 // pred_fallthru
          _
      $region12: #{tpu_custom_call.1} parent=5 // pred_fallthru
        _
      %p174 = scmp.lt.s32.totalorder %s17, 2
      // Predicated region
      $region25: #{tpu_custom_call.1} parent=5 // pred_check
        %p175 = pneg %p174
      $region26: #{tpu_custom_call.1} parent=5 // pred_check_branch
        %177 = sbr.rel (%p175) target = $region28
      $region27: #{tpu_custom_call.1} parent=5 // pred_region
        // Predicated region
        $region29: #{tpu_custom_call.1} parent=27 // pred_check
          %p178 = pneg %p37
        $region30: #{tpu_custom_call.1} parent=27 // pred_check_branch
          %180 = sbr.rel (%p178) target = $region32
        $region31: #{tpu_custom_call.1} parent=27 // pred_region
          %s181 = sand.u32 %s27, 1
          %s182 = scalar_lea.sflag [#allocation5], %s181
          %s183 = sand.u32 %s27, 1
          %s184 = smul.addr %s183, 16
          %s185 = scalar_lea.vmem [#allocation4], %s184
          %s187 = ssub.s32 256, 256
          %188 = vsyncadd %s182, %s187
          %s189 = smul.addr %s17, 2
          %s190 = smul.addr %s189, 128
          %s191 = scalar_lea.hbm %s0, %s190
          %s193 = sshll.u32 %s185, 4
          %s194 = int_to_ptr.vmem [resolvable:$true] %s193
          %196 = dma.hbm_to_vmem [thread:$0]  %s191, 256, %s194, %s182
        $region32: #{tpu_custom_call.1} parent=27 // pred_fallthru
          _
      $region28: #{tpu_custom_call.1} parent=5 // pred_fallthru
        _
      %p197 = scmp.le.s32.totalorder 1, %s17
      %p198 = scmp.lt.s32.totalorder %s17, 3
      %p199 = pnand %p197, %p198
      %p200 = pneg %p199
      // Predicated region
      $region33: #{tpu_custom_call.1} parent=5 // pred_check
        _
      $region34: #{tpu_custom_call.1} parent=5 // pred_check_branch
        %202 = sbr.rel (%p199) target = $region36
      $region35: #{tpu_custom_call.1} parent=5 // pred_region
        %s203 = ssub.s32 %s17, 1
        %s204 = sand.u32 %s30, 1
        %s205 = scalar_lea.sflag [#allocation5], %s204
        %s206 = sand.u32 %s30, 1
        %s207 = smul.addr %s206, 16
        %s208 = scalar_lea.vmem [#allocation4], %s207
        // Predicated region
        $region37: #{tpu_custom_call.1} parent=35 // pred_check
          %p209 = pneg %p43
        $region38: #{tpu_custom_call.1} parent=35 // pred_check_branch
          %211 = sbr.rel (%p209) target = $region40
        $region39: #{tpu_custom_call.1} parent=35 // pred_region
          %212 = dma.done %s205, 256
        $region40: #{tpu_custom_call.1} parent=35 // pred_fallthru
          _
        // Predicated region
        $region41: #{tpu_custom_call.1} parent=35 // pred_check
          %p213 = pneg %p64
        $region42: #{tpu_custom_call.1} parent=35 // pred_check_branch
          %215 = sbr.rel (%p213) target = $region44
        $region43: #{tpu_custom_call.1} parent=35 // pred_region
          %216 = dma.done [#allocation8], 512
        $region44: #{tpu_custom_call.1} parent=35 // pred_fallthru
          _
        // Predicated region
        $region45: #{tpu_custom_call.1} parent=35 // pred_check
          %p217 = pneg %p85
        $region46: #{tpu_custom_call.1} parent=35 // pred_check_branch
          %219 = sbr.rel (%p217) target = $region48
        $region47: #{tpu_custom_call.1} parent=35 // pred_region
          %220 = dma.done [#allocation8], 128
        $region48: #{tpu_custom_call.1} parent=35 // pred_fallthru
          _
        %s221 = sand.u32 %s30, 1
        %s222 = scalar_lea.sflag [#allocation5], %s221
        %s223 = sand.u32 %s30, 1
        %s224 = smul.addr %s223, 16
        %s225 = scalar_lea.vmem [#allocation4], %s224
        %p226 = pneg %p43
        %p227 = pneg %p40
        %p228 = pneg %p64
        %p229 = pneg %p61
        %p230 = pneg %p85
        %p231 = pneg %p82
        %p232 = pneg %p106
        %p233 = pneg %p103
        %p234 = pneg %p132
        %p235 = pneg %p129
        %s236 = sand.u32 %s119, 1
        %s237 = scalar_lea.sflag [#allocation6], %s236
        %s238 = sand.u32 %s119, 1
        %s239 = smul.addr %s238, 16
        %s240 = scalar_lea.vmem [#allocation10], %s239
        %v241 = vlaneseq
        %vm242 = vcmp.ge.s32.totalorder %v241, 0
        %vm243 = vcmp.lt.s32.totalorder %v241, 256
        %vm244 = vmand %vm242, %vm243
        %s245 = scalar_lea.vmem [#allocation2], 68
        %246 = vst.msk [vmem:[%s245] ss:$8 sm:$0x3] %vm244, 1.0
        %247 = vst.msk [vmem:[%s245] ss:$8 sm:$0x0] %vm244, 1.0
        %s248 = scalar_lea.vmem [#allocation3], 144
        %249 = vst.msk [vmem:[%s248] ss:$8 sm:$0x3] %vm244, 1.0
        %250 = vst.msk [vmem:[%s248] ss:$8 sm:$0x0] %vm244, 1.0
        %v251 = vld [vmem:[%s208] sm:$0xf]
        %v252 = vld [vmem:[%s208 + $0x8] sm:$0xf]
        %253 = vrot.lane.b32.xlu0 %v251, 17
        %v254 = vpop.permute.xlu0 %253
        %255 = vrot.lane.b32.xlu0 %v252, 17
        %v256 = vpop.permute.xlu0 %255
        %v257 = vlaneseq
        %v258 = vand.u32 %v257, 127
        %vm259 = vcmp.lt.s32.totalorder %v258, 17
        %v260 = vsel %vm259, %v254, %v256
        %v261 = vsel %vm259, %v256, %v254
        %v262 = vld [vmem:[#allocation7] ss:$8 sm:$0x3]
        %v264 = vlaneseq
        %v265 = vshrl.u32 %v264, 7
        %v266 = vsub.s32 0, %v265
        %v267 = vrot.slane %v262, %v266
        %v268 = vlaneseq
        %v269 = vshrl.u32 %v268, 7
        %v270 = vsub.s32 1, %v269
        %v271 = vrot.slane %v262, %v270
        %v274 = vmul.f32 %v261, %v267
        %v275 = vmul.f32 %v260, %v271
        %276 = vst [vmem:[#allocation2] sm:$0xf] %v274
        %277 = vst [vmem:[#allocation2 + $0x8] sm:$0xf] %v275
        %278 = vrot.lane.b32.xlu0 %v251, 16
        %v279 = vpop.permute.xlu0 %278
        %280 = vrot.lane.b32.xlu0 %v252, 16
        %v281 = vpop.permute.xlu0 %280
        %vm282 = vcmp.lt.s32.totalorder %v258, 16
        %v283 = vsel %vm282, %v279, %v281
        %v284 = vsel %vm282, %v281, %v279
        %s285 = scalar_lea.vmem [#allocation7], 1
        %v286 = vld [vmem:[%s285] ss:$8 sm:$0x3]
        %v288 = vlaneseq
        %v289 = vshrl.u32 %v288, 7
        %v290 = vsub.s32 0, %v289
        %v291 = vrot.slane %v286, %v290
        %v292 = vlaneseq
        %v293 = vshrl.u32 %v292, 7
        %v294 = vsub.s32 1, %v293
        %v295 = vrot.slane %v286, %v294
        %v298 = vmul.f32 %v284, %v291
        %v299 = vmul.f32 %v283, %v295
        %v302 = vrot.slane %v298, 4
        %v303 = vrot.slane %v299, 4
        %306 = vst [vmem:[#allocation2] sm:$0xf0] %v302
        %307 = vst [vmem:[#allocation2 + $0x8] sm:$0xf0] %v303
        %308 = vrot.lane.b32.xlu0 %v251, 15
        %v309 = vpop.permute.xlu0 %308
        %310 = vrot.lane.b32.xlu0 %v252, 15
        %v311 = vpop.permute.xlu0 %310
        %vm312 = vcmp.lt.s32.totalorder %v258, 15
        %v313 = vsel %vm312, %v309, %v311
        %v314 = vsel %vm312, %v311, %v309
        %s315 = scalar_lea.vmem [#allocation7], 2
        %v316 = vld [vmem:[%s315] ss:$8 sm:$0x3]
        %v318 = vlaneseq
        %v319 = vshrl.u32 %v318, 7
        %v320 = vsub.s32 0, %v319
        %v321 = vrot.slane %v316, %v320
        %v322 = vlaneseq
        %v323 = vshrl.u32 %v322, 7
        %v324 = vsub.s32 1, %v323
        %v325 = vrot.slane %v316, %v324
        %v328 = vmul.f32 %v314, %v321
        %v329 = vmul.f32 %v313, %v325
        %330 = vst [vmem:[#allocation2 + $0x10] sm:$0xf] %v328
        %331 = vst [vmem:[#allocation2 + $0x18] sm:$0xf] %v329
        %332 = vrot.lane.b32.xlu0 %v251, 1
        %v333 = vpop.permute.xlu0 %332
        %334 = vrot.lane.b32.xlu0 %v252, 1
        %v335 = vpop.permute.xlu0 %334
        %vm336 = vcmp.lt.s32.totalorder %v258, 1
        %v337 = vsel %vm336, %v333, %v335
        %v338 = vsel %vm336, %v335, %v333
        %s339 = scalar_lea.vmem [#allocation7], 3
        %v340 = vld [vmem:[%s339] ss:$8 sm:$0x3]
        %v342 = vlaneseq
        %v343 = vshrl.u32 %v342, 7
        %v344 = vsub.s32 0, %v343
        %v345 = vrot.slane %v340, %v344
        %v346 = vlaneseq
        %v347 = vshrl.u32 %v346, 7
        %v348 = vsub.s32 1, %v347
        %v349 = vrot.slane %v340, %v348
        %v352 = vmul.f32 %v338, %v345
        %v353 = vmul.f32 %v337, %v349
        %v356 = vrot.slane %v352, 4
        %v357 = vrot.slane %v353, 4
        %360 = vst [vmem:[#allocation2 + $0x10] sm:$0xf0] %v356
        %361 = vst [vmem:[#allocation2 + $0x18] sm:$0xf0] %v357
        %362 = vst [vmem:[#allocation2 + $0x20] sm:$0xf] %v251
        %363 = vst [vmem:[#allocation2 + $0x28] sm:$0xf] %v252
        %364 = vrot.lane.b32.xlu0 %v251, 127
        %v365 = vpop.permute.xlu0 %364
        %366 = vrot.lane.b32.xlu0 %v252, 127
        %v367 = vpop.permute.xlu0 %366
        %vm368 = vcmp.lt.s32.totalorder %v258, 127
        %v369 = vsel %vm368, %v365, %v367
        %v370 = vsel %vm368, %v367, %v365
        %s371 = scalar_lea.vmem [#allocation7], 5
        %v372 = vld [vmem:[%s371] ss:$8 sm:$0x3]
        %v374 = vlaneseq
        %v375 = vshrl.u32 %v374, 7
        %v376 = vsub.s32 0, %v375
        %v377 = vrot.slane %v372, %v376
        %v378 = vlaneseq
        %v379 = vshrl.u32 %v378, 7
        %v380 = vsub.s32 1, %v379
        %v381 = vrot.slane %v372, %v380
        %v384 = vmul.f32 %v369, %v377
        %v385 = vmul.f32 %v370, %v381
        %v388 = vrot.slane %v384, 4
        %v389 = vrot.slane %v385, 4
        %392 = vst [vmem:[#allocation2 + $0x20] sm:$0xf0] %v388
        %393 = vst [vmem:[#allocation2 + $0x28] sm:$0xf0] %v389
        %394 = vrot.lane.b32.xlu0 %v251, 113
        %v395 = vpop.permute.xlu0 %394
        %396 = vrot.lane.b32.xlu0 %v252, 113
        %v397 = vpop.permute.xlu0 %396
        %vm398 = vcmp.lt.s32.totalorder %v258, 113
        %v399 = vsel %vm398, %v395, %v397
        %v400 = vsel %vm398, %v397, %v395
        %s401 = scalar_lea.vmem [#allocation7], 6
        %v402 = vld [vmem:[%s401] ss:$8 sm:$0x3]
        %v404 = vlaneseq
        %v405 = vshrl.u32 %v404, 7
        %v406 = vsub.s32 0, %v405
        %v407 = vrot.slane %v402, %v406
        %v408 = vlaneseq
        %v409 = vshrl.u32 %v408, 7
        %v410 = vsub.s32 1, %v409
        %v411 = vrot.slane %v402, %v410
        %v414 = vmul.f32 %v399, %v407
        %v415 = vmul.f32 %v400, %v411
        %416 = vst [vmem:[#allocation2 + $0x30] sm:$0xf] %v414
        %417 = vst [vmem:[#allocation2 + $0x38] sm:$0xf] %v415
        %418 = vrot.lane.b32.xlu0 %v251, 112
        %v419 = vpop.permute.xlu0 %418
        %420 = vrot.lane.b32.xlu0 %v252, 112
        %v421 = vpop.permute.xlu0 %420
        %vm422 = vcmp.lt.s32.totalorder %v258, 112
        %v423 = vsel %vm422, %v419, %v421
        %v424 = vsel %vm422, %v421, %v419
        %s425 = scalar_lea.vmem [#allocation7], 7
        %v426 = vld [vmem:[%s425] ss:$8 sm:$0x3]
        %v428 = vlaneseq
        %v429 = vshrl.u32 %v428, 7
        %v430 = vsub.s32 0, %v429
        %v431 = vrot.slane %v426, %v430
        %v432 = vlaneseq
        %v433 = vshrl.u32 %v432, 7
        %v434 = vsub.s32 1, %v433
        %v435 = vrot.slane %v426, %v434
        %v438 = vmul.f32 %v423, %v431
        %v439 = vmul.f32 %v424, %v435
        %v442 = vrot.slane %v438, 4
        %v443 = vrot.slane %v439, 4
        %446 = vst [vmem:[#allocation2 + $0x30] sm:$0xf0] %v442
        %447 = vst [vmem:[#allocation2 + $0x38] sm:$0xf0] %v443
        %448 = vrot.lane.b32.xlu0 %v251, 111
        %v449 = vpop.permute.xlu0 %448
        %450 = vrot.lane.b32.xlu0 %v252, 111
        %v451 = vpop.permute.xlu0 %450
        %vm452 = vcmp.lt.s32.totalorder %v258, 111
        %v453 = vsel %vm452, %v449, %v451
        %v454 = vsel %vm452, %v451, %v449
        %s455 = scalar_lea.vmem [#allocation7], 16
        %v456 = vld [vmem:[%s455] ss:$8 sm:$0x3]
        %v458 = vlaneseq
        %v459 = vshrl.u32 %v458, 7
        %v460 = vsub.s32 0, %v459
        %v461 = vrot.slane %v456, %v460
        %v462 = vlaneseq
        %v463 = vshrl.u32 %v462, 7
        %v464 = vsub.s32 1, %v463
        %v465 = vrot.slane %v456, %v464
        %v468 = vmul.f32 %v453, %v461
        %v469 = vmul.f32 %v454, %v465
        %470 = vst [vmem:[#allocation2 + $0x40] sm:$0xf] %v468
        %471 = vst [vmem:[#allocation2 + $0x48] sm:$0xf] %v469
        %v472 = vld [vmem:[#allocation9] sm:$0xff]
        %v473 = vld [vmem:[#allocation2] sm:$0xff]
        %v474 = vld [vmem:[#allocation2 + $0x8] sm:$0xff]
        %v475 = vld [vmem:[#allocation2 + $0x10] sm:$0xff]
        %v476 = vld [vmem:[#allocation2 + $0x18] sm:$0xff]
        %v477 = vld [vmem:[#allocation2 + $0x20] sm:$0xff]
        %v478 = vld [vmem:[#allocation2 + $0x28] sm:$0xff]
        %v479 = vld [vmem:[#allocation2 + $0x30] sm:$0xff]
        %v480 = vld [vmem:[#allocation2 + $0x38] sm:$0xff]
        %v481 = vld [vmem:[#allocation2 + $0x40] sm:$0x1f]
        %v482 = vld [vmem:[#allocation2 + $0x48] sm:$0x1f]
        %vm483 = vcmask 302080
        %v485 = vsel %vm483, %v472, 0
        %vm487 = vcmask 1044480
        %v489 = vsel %vm487, %v481, 0
        %v492 = vsel %vm487, %v482, 0
        %494 = vmatprep.subr.mxu0 0.0
        %495 = vmatpush1.msra.mxu0 0.0
        %496 = vmatprep.subr.mxu0 0.0
        %497 = vmatpush1.msra.mxu0 0.0
        %498 = vmatprep.subr.mxu0 0.0
        %499 = vmatpush1.msra.mxu0 0.0
        %500 = vmatprep.subr.mxu0 0.0
        %501 = vmatpush1.msra.mxu0 0.0
        %502 = vmatprep.subr.mxu0 0.0
        %503 = vmatpush1.msra.mxu0 0.0
        %504 = vmatprep.subr.mxu0 0.0
        %505 = vmatpush1.msra.mxu0 0.0
        %506 = vmatprep.subr.mxu0 0.0
        %507 = vmatpush1.msra.mxu0 0.0
        %508 = vmatprep.subr.mxu0 0.0
        %509 = vmatpush1.msra.mxu0 0.0
        %510 = vmatprep.subr.mxu0 0.0
        %511 = vmatpush1.msra.mxu0 0.0
        %512 = vmatprep.subr.mxu0 0.0
        %513 = vmatpush1.msra.mxu0 0.0
        %514 = vmatprep.subr.mxu0 0.0
        %515 = vmatpush1.msra.mxu0 0.0
        %516 = vmatprep.subr.mxu0 %v492
        %517 = vmatpush1.msra.mxu0 %v489
        %518 = vmatprep.subr.mxu0 %v480
        %519 = vmatpush1.msra.mxu0 %v479
        %520 = vmatprep.subr.mxu0 %v478
        %521 = vmatpush1.msra.mxu0 %v477
        %522 = vmatprep.subr.mxu0 %v476
        %523 = vmatpush1.msra.mxu0 %v475
        %524 = vmatprep.subr.mxu0 %v474
        %525 = vmatpush1.msra.mxu0 %v473
        %526 = vmatprep.subr.mxu0 0.0
        %527 = vmatpush2.msra.mxu0 0.0
        %528 = vmatprep.subr.mxu0 0.0
        %529 = vmatpush2.msra.mxu0 0.0
        %530 = vmatprep.subr.mxu0 0.0
        %531 = vmatpush2.msra.mxu0 0.0
        %532 = vmatprep.subr.mxu0 0.0
        %533 = vmatpush2.msra.mxu0 0.0
        %534 = vmatprep.subr.mxu0 0.0
        %535 = vmatpush2.msra.mxu0 0.0
        %536 = vmatprep.subr.mxu0 0.0
        %537 = vmatpush2.msra.mxu0 0.0
        %538 = vmatprep.subr.mxu0 0.0
        %539 = vmatpush2.msra.mxu0 0.0
        %540 = vmatprep.subr.mxu0 0.0
        %541 = vmatpush2.msra.mxu0 0.0
        %542 = vmatprep.subr.mxu0 0.0
        %543 = vmatpush2.msra.mxu0 0.0
        %544 = vmatprep.subr.mxu0 0.0
        %545 = vmatpush2.msra.mxu0 0.0
        %546 = vmatprep.subr.mxu0 0.0
        %547 = vmatpush2.msra.mxu0 0.0
        %548 = vmatprep.subr.mxu0 0.0
        %549 = vmatpush2.msra.mxu0 0.0
        %550 = vmatprep.subr.mxu0 0.0
        %551 = vmatpush2.msra.mxu0 0.0
        %552 = vmatprep.subr.mxu0 0.0
        %553 = vmatpush2.msra.mxu0 0.0
        %554 = vmatprep.subr.mxu0 0.0
        %555 = vmatpush2.msra.mxu0 0.0
        %556 = vmatprep.subr.mxu0 0.0
        %557 = vmatpush2.msra.mxu0 0.0
        %558 = vmatprep.mubr.f32.mxu0 0.0
        %559 = vmatmul.mubr.f32.gmra.mxu0 %v485
        %v560 = vpop.f32.mrf.mxu0
        %v561 = vadd.f32 0.0, %v560
        %v562 = vpop.f32.mrf.mxu0
        %v563 = vadd.f32 0.0, %v562
        %564 = vdwg.mxu0
        %v565 = vadd.f32 %v561, %v563
        %566 = vadd.xlane.f32.xlu0 %v565
        %v567 = vpop.xlane.xlu0 %566
        %v568 = vmul.f32 %v567, 0.00390625
        %v569 = vsub.f32 %v561, %v568
        %v570 = vsub.f32 %v563, %v568
        %v571 = vmul.f32 %v569, %v569
        %v572 = vmul.f32 %v570, %v570
        %v573 = vadd.f32 %v571, %v572
        %574 = vadd.xlane.f32.xlu0 %v573
        %v575 = vpop.xlane.xlu0 %574
        %v576 = vmul.f32 %v575, 0.00390625
        %v577 = vadd.f32 %v576, 1e-05
        %v578 = vrsqrt.pop %v577
        %v579 = vmul.f32 %v569, %v578
        %v580 = vmul.f32 %v570, %v578
        %v581 = vtanh.pop %v579
        %v582 = vtanh.pop %v580
        %583 = vrot.lane.b32.xlu0 %v581, 17
        %v584 = vpop.permute.xlu0 %583
        %585 = vrot.lane.b32.xlu0 %v582, 17
        %v586 = vpop.permute.xlu0 %585
        %v587 = vsel %vm259, %v584, %v586
        %v588 = vsel %vm259, %v586, %v584
        %v589 = vld [vmem:[#allocation7] ss:$8 sm:$0x3]
        %v591 = vlaneseq
        %v592 = vshrl.u32 %v591, 7
        %v593 = vsub.s32 0, %v592
        %v594 = vrot.slane %v589, %v593
        %v595 = vlaneseq
        %v596 = vshrl.u32 %v595, 7
        %v597 = vsub.s32 1, %v596
        %v598 = vrot.slane %v589, %v597
        %v601 = vmul.f32 %v588, %v594
        %v602 = vmul.f32 %v587, %v598
        %603 = vst [vmem:[#allocation3] sm:$0xff] %v601
        %604 = vst [vmem:[#allocation3 + $0x8] sm:$0xff] %v602
        %605 = vrot.lane.b32.xlu0 %v581, 16
        %v606 = vpop.permute.xlu0 %605
        %607 = vrot.lane.b32.xlu0 %v582, 16
        %v608 = vpop.permute.xlu0 %607
        %v609 = vsel %vm282, %v606, %v608
        %v610 = vsel %vm282, %v608, %v606
        %v611 = vld [vmem:[%s285] ss:$8 sm:$0x3]
        %v613 = vlaneseq
        %v614 = vshrl.u32 %v613, 7
        %v615 = vsub.s32 0, %v614
        %v616 = vrot.slane %v611, %v615
        %v617 = vlaneseq
        %v618 = vshrl.u32 %v617, 7
        %v619 = vsub.s32 1, %v618
        %v620 = vrot.slane %v611, %v619
        %v623 = vmul.f32 %v610, %v616
        %v624 = vmul.f32 %v609, %v620
        %625 = vst [vmem:[#allocation3 + $0x10] sm:$0xff] %v623
        %626 = vst [vmem:[#allocation3 + $0x18] sm:$0xff] %v624
        %627 = vrot.lane.b32.xlu0 %v581, 15
        %v628 = vpop.permute.xlu0 %627
        %629 = vrot.lane.b32.xlu0 %v582, 15
        %v630 = vpop.permute.xlu0 %629
        %v631 = vsel %vm312, %v628, %v630
        %v632 = vsel %vm312, %v630, %v628
        %v633 = vld [vmem:[%s315] ss:$8 sm:$0x3]
        %v635 = vlaneseq
        %v636 = vshrl.u32 %v635, 7
        %v637 = vsub.s32 0, %v636
        %v638 = vrot.slane %v633, %v637
        %v639 = vlaneseq
        %v640 = vshrl.u32 %v639, 7
        %v641 = vsub.s32 1, %v640
        %v642 = vrot.slane %v633, %v641
        %v645 = vmul.f32 %v632, %v638
        %v646 = vmul.f32 %v631, %v642
        %647 = vst [vmem:[#allocation3 + $0x20] sm:$0xff] %v645
        %648 = vst [vmem:[#allocation3 + $0x28] sm:$0xff] %v646
        %649 = vrot.lane.b32.xlu0 %v581, 1
        %v650 = vpop.permute.xlu0 %649
        %651 = vrot.lane.b32.xlu0 %v582, 1
        %v652 = vpop.permute.xlu0 %651
        %v653 = vsel %vm336, %v650, %v652
        %v654 = vsel %vm336, %v652, %v650
        %v655 = vld [vmem:[%s339] ss:$8 sm:$0x3]
        %v657 = vlaneseq
        %v658 = vshrl.u32 %v657, 7
        %v659 = vsub.s32 0, %v658
        %v660 = vrot.slane %v655, %v659
        %v661 = vlaneseq
        %v662 = vshrl.u32 %v661, 7
        %v663 = vsub.s32 1, %v662
        %v664 = vrot.slane %v655, %v663
        %v667 = vmul.f32 %v654, %v660
        %v668 = vmul.f32 %v653, %v664
        %669 = vst [vmem:[#allocation3 + $0x30] sm:$0xff] %v667
        %670 = vst [vmem:[#allocation3 + $0x38] sm:$0xff] %v668
        %671 = vst [vmem:[#allocation3 + $0x40] sm:$0xff] %v581
        %672 = vst [vmem:[#allocation3 + $0x48] sm:$0xff] %v582
        %673 = vrot.lane.b32.xlu0 %v581, 127
        %v674 = vpop.permute.xlu0 %673
        %675 = vrot.lane.b32.xlu0 %v582, 127
        %v676 = vpop.permute.xlu0 %675
        %v677 = vsel %vm368, %v674, %v676
        %v678 = vsel %vm368, %v676, %v674
        %v679 = vld [vmem:[%s371] ss:$8 sm:$0x3]
        %v681 = vlaneseq
        %v682 = vshrl.u32 %v681, 7
        %v683 = vsub.s32 0, %v682
        %v684 = vrot.slane %v679, %v683
        %v685 = vlaneseq
        %v686 = vshrl.u32 %v685, 7
        %v687 = vsub.s32 1, %v686
        %v688 = vrot.slane %v679, %v687
        %v691 = vmul.f32 %v677, %v684
        %v692 = vmul.f32 %v678, %v688
        %693 = vst [vmem:[#allocation3 + $0x50] sm:$0xff] %v691
        %694 = vst [vmem:[#allocation3 + $0x58] sm:$0xff] %v692
        %695 = vrot.lane.b32.xlu0 %v581, 113
        %v696 = vpop.permute.xlu0 %695
        %697 = vrot.lane.b32.xlu0 %v582, 113
        %v698 = vpop.permute.xlu0 %697
        %v699 = vsel %vm398, %v696, %v698
        %v700 = vsel %vm398, %v698, %v696
        %v701 = vld [vmem:[%s401] ss:$8 sm:$0x3]
        %v703 = vlaneseq
        %v704 = vshrl.u32 %v703, 7
        %v705 = vsub.s32 0, %v704
        %v706 = vrot.slane %v701, %v705
        %v707 = vlaneseq
        %v708 = vshrl.u32 %v707, 7
        %v709 = vsub.s32 1, %v708
        %v710 = vrot.slane %v701, %v709
        %v713 = vmul.f32 %v699, %v706
        %v714 = vmul.f32 %v700, %v710
        %715 = vst [vmem:[#allocation3 + $0x60] sm:$0xff] %v713
        %716 = vst [vmem:[#allocation3 + $0x68] sm:$0xff] %v714
        %717 = vrot.lane.b32.xlu0 %v581, 112
        %v718 = vpop.permute.xlu0 %717
        %719 = vrot.lane.b32.xlu0 %v582, 112
        %v720 = vpop.permute.xlu0 %719
        %v721 = vsel %vm422, %v718, %v720
        %v722 = vsel %vm422, %v720, %v718
        %v723 = vld [vmem:[%s425] ss:$8 sm:$0x3]
        %v725 = vlaneseq
        %v726 = vshrl.u32 %v725, 7
        %v727 = vsub.s32 0, %v726
        %v728 = vrot.slane %v723, %v727
        %v729 = vlaneseq
        %v730 = vshrl.u32 %v729, 7
        %v731 = vsub.s32 1, %v730
        %v732 = vrot.slane %v723, %v731
        %v735 = vmul.f32 %v721, %v728
        %v736 = vmul.f32 %v722, %v732
        %737 = vst [vmem:[#allocation3 + $0x70] sm:$0xff] %v735
        %738 = vst [vmem:[#allocation3 + $0x78] sm:$0xff] %v736
        %739 = vrot.lane.b32.xlu0 %v581, 111
        %v740 = vpop.permute.xlu0 %739
        %741 = vrot.lane.b32.xlu0 %v582, 111
        %v742 = vpop.permute.xlu0 %741
        %v743 = vsel %vm452, %v740, %v742
        %v744 = vsel %vm452, %v742, %v740
        %v745 = vld [vmem:[%s455] ss:$8 sm:$0x3]
        %v747 = vlaneseq
        %v748 = vshrl.u32 %v747, 7
        %v749 = vsub.s32 0, %v748
        %v750 = vrot.slane %v745, %v749
        %v751 = vlaneseq
        %v752 = vshrl.u32 %v751, 7
        %v753 = vsub.s32 1, %v752
        %v754 = vrot.slane %v745, %v753
        %v757 = vmul.f32 %v743, %v750
        %v758 = vmul.f32 %v744, %v754
        %759 = vst [vmem:[#allocation3 + $0x80] sm:$0xff] %v757
        %760 = vst [vmem:[#allocation3 + $0x88] sm:$0xff] %v758
        %v761 = vld [vmem:[%s3] sm:$0xf]
        %v762 = vld [vmem:[#allocation3] sm:$0xff]
        %v763 = vld [vmem:[#allocation3 + $0x8] sm:$0xff]
        %v764 = vld [vmem:[#allocation3 + $0x10] sm:$0xff]
        %v765 = vld [vmem:[#allocation3 + $0x18] sm:$0xff]
        %v766 = vld [vmem:[#allocation3 + $0x20] sm:$0xff]
        %v767 = vld [vmem:[#allocation3 + $0x28] sm:$0xff]
        %v768 = vld [vmem:[#allocation3 + $0x30] sm:$0xff]
        %v769 = vld [vmem:[#allocation3 + $0x38] sm:$0xff]
        %v770 = vld [vmem:[#allocation3 + $0x40] sm:$0xff]
        %v771 = vld [vmem:[#allocation3 + $0x48] sm:$0xff]
        %v772 = vld [vmem:[#allocation3 + $0x50] sm:$0xff]
        %v773 = vld [vmem:[#allocation3 + $0x58] sm:$0xff]
        %v774 = vld [vmem:[#allocation3 + $0x60] sm:$0xff]
        %v775 = vld [vmem:[#allocation3 + $0x68] sm:$0xff]
        %v776 = vld [vmem:[#allocation3 + $0x70] sm:$0xff]
        %v777 = vld [vmem:[#allocation3 + $0x78] sm:$0xff]
        %v778 = vld [vmem:[#allocation3 + $0x80] sm:$0xff]
        %v779 = vld [vmem:[#allocation3 + $0x88] sm:$0xff]
        %v780 = vld [vmem:[#allocation3 + $0x90] sm:$0x1]
        %v781 = vld [vmem:[#allocation3 + $0x98] sm:$0x1]
        %vm782 = vcmask 596992
        %v784 = vsel %vm782, %v761, 0
        %vm786 = vcmask 1040384
        %v788 = vsel %vm786, %v780, 0
        %v791 = vsel %vm786, %v781, 0
        %793 = vmatprep.subr.mxu0 0.0
        %794 = vmatpush1.msra.mxu0 0.0
        %795 = vmatprep.subr.mxu0 0.0
        %796 = vmatpush1.msra.mxu0 0.0
        %797 = vmatprep.subr.mxu0 0.0
        %798 = vmatpush1.msra.mxu0 0.0
        %799 = vmatprep.subr.mxu0 0.0
        %800 = vmatpush1.msra.mxu0 0.0
        %801 = vmatprep.subr.mxu0 0.0
        %802 = vmatpush1.msra.mxu0 0.0
        %803 = vmatprep.subr.mxu0 0.0
        %804 = vmatpush1.msra.mxu0 0.0
        %805 = vmatprep.subr.mxu0 %v791
        %806 = vmatpush1.msra.mxu0 %v788
        %807 = vmatprep.subr.mxu0 %v779
        %808 = vmatpush1.msra.mxu0 %v778
        %809 = vmatprep.subr.mxu0 %v777
        %810 = vmatpush1.msra.mxu0 %v776
        %811 = vmatprep.subr.mxu0 %v775
        %812 = vmatpush1.msra.mxu0 %v774
        %813 = vmatprep.subr.mxu0 %v773
        %814 = vmatpush1.msra.mxu0 %v772
        %815 = vmatprep.subr.mxu0 %v771
        %816 = vmatpush1.msra.mxu0 %v770
        %817 = vmatprep.subr.mxu0 %v769
        %818 = vmatpush1.msra.mxu0 %v768
        %819 = vmatprep.subr.mxu0 %v767
        %820 = vmatpush1.msra.mxu0 %v766
        %821 = vmatprep.subr.mxu0 %v765
        %822 = vmatpush1.msra.mxu0 %v764
        %823 = vmatprep.subr.mxu0 %v763
        %824 = vmatpush1.msra.mxu0 %v762
        %825 = vmatprep.subr.mxu0 0.0
        %826 = vmatpush2.msra.mxu0 0.0
        %827 = vmatprep.subr.mxu0 0.0
        %828 = vmatpush2.msra.mxu0 0.0
        %829 = vmatprep.subr.mxu0 0.0
        %830 = vmatpush2.msra.mxu0 0.0
        %831 = vmatprep.subr.mxu0 0.0
        %832 = vmatpush2.msra.mxu0 0.0
        %833 = vmatprep.subr.mxu0 0.0
        %834 = vmatpush2.msra.mxu0 0.0
        %835 = vmatprep.subr.mxu0 0.0
        %836 = vmatpush2.msra.mxu0 0.0
        %837 = vmatprep.subr.mxu0 0.0
        %838 = vmatpush2.msra.mxu0 0.0
        %839 = vmatprep.subr.mxu0 0.0
        %840 = vmatpush2.msra.mxu0 0.0
        %841 = vmatprep.subr.mxu0 0.0
        %842 = vmatpush2.msra.mxu0 0.0
        %843 = vmatprep.subr.mxu0 0.0
        %844 = vmatpush2.msra.mxu0 0.0
        %845 = vmatprep.subr.mxu0 0.0
        %846 = vmatpush2.msra.mxu0 0.0
        %847 = vmatprep.subr.mxu0 0.0
        %848 = vmatpush2.msra.mxu0 0.0
        %849 = vmatprep.subr.mxu0 0.0
        %850 = vmatpush2.msra.mxu0 0.0
        %851 = vmatprep.subr.mxu0 0.0
        %852 = vmatpush2.msra.mxu0 0.0
        %853 = vmatprep.subr.mxu0 0.0
        %854 = vmatpush2.msra.mxu0 0.0
        %855 = vmatprep.subr.mxu0 0.0
        %856 = vmatpush2.msra.mxu0 0.0
        %857 = vmatprep.mubr.f32.mxu0 0.0
        %858 = vmatmul.mubr.f32.gmra.mxu0 %v784
        %v859 = vpop.f32.mrf.mxu0
        %v860 = vadd.f32 0.0, %v859
        %v861 = vpop.f32.mrf.mxu0
        %v862 = vadd.f32 0.0, %v861
        %863 = vdwg.mxu0
        %vm864 = vcmask 1043456
        %v865 = vsel %vm864, %v860, 0.0
        %v866 = vsel %vm864, %v862, 0.0
        %v867 = vadd.f32 %v865, %v866
        %868 = vadd.xlane.f32.xlu0 %v867
        %v869 = vpop.xlane.xlu0 %868
        %v870 = vmul.f32 %v869, 0.00390625
        %v871 = vsub.f32 %v860, %v870
        %v872 = vsub.f32 %v862, %v870
        %v873 = vmul.f32 %v871, %v871
        %v874 = vmul.f32 %v872, %v872
        %v875 = vsel %vm864, %v873, 0.0
        %v876 = vsel %vm864, %v874, 0.0
        %v877 = vadd.f32 %v875, %v876
        %878 = vadd.xlane.f32.xlu0 %v877
        %v879 = vpop.xlane.xlu0 %878
        %v880 = vmul.f32 %v879, 0.00390625
        %v881 = vadd.f32 %v880, 1e-05
        %v882 = vrsqrt.pop %v881
        %v883 = vmul.f32 %v871, %v882
        %v884 = vmul.f32 %v872, %v882
        %v885 = vtanh.pop %v883
        %v886 = vtanh.pop %v884
        %887 = vst [vmem:[%s240] sm:$0xf] %v885
        %888 = vst [vmem:[%s240 + $0x8] sm:$0xf] %v886
        %v889 = vld [vmem:[%s208] sm:$0xf0]
        %v890 = vld [vmem:[%s208 + $0x8] sm:$0xf0]
        %v893 = vrot.slane %v889, 4
        %v894 = vrot.slane %v890, 4
        %897 = vrot.lane.b32.xlu0 %v893, 17
        %v898 = vpop.permute.xlu0 %897
        %899 = vrot.lane.b32.xlu0 %v894, 17
        %v900 = vpop.permute.xlu0 %899
        %v901 = vsel %vm259, %v898, %v900
        %v902 = vsel %vm259, %v900, %v898
        %v903 = vld [vmem:[#allocation7] ss:$8 sm:$0x3]
        %v905 = vlaneseq
        %v906 = vshrl.u32 %v905, 7
        %v907 = vsub.s32 0, %v906
        %v908 = vrot.slane %v903, %v907
        %v909 = vlaneseq
        %v910 = vshrl.u32 %v909, 7
        %v911 = vsub.s32 1, %v910
        %v912 = vrot.slane %v903, %v911
        %v915 = vmul.f32 %v902, %v908
        %v916 = vmul.f32 %v901, %v912
        %917 = vst [vmem:[#allocation2] sm:$0xf] %v915
        %918 = vst [vmem:[#allocation2 + $0x8] sm:$0xf] %v916
        %919 = vrot.lane.b32.xlu0 %v893, 16
        %v920 = vpop.permute.xlu0 %919
        %921 = vrot.lane.b32.xlu0 %v894, 16
        %v922 = vpop.permute.xlu0 %921
        %v923 = vsel %vm282, %v920, %v922
        %v924 = vsel %vm282, %v922, %v920
        %v925 = vld [vmem:[%s285] ss:$8 sm:$0x3]
        %v927 = vlaneseq
        %v928 = vshrl.u32 %v927, 7
        %v929 = vsub.s32 0, %v928
        %v930 = vrot.slane %v925, %v929
        %v931 = vlaneseq
        %v932 = vshrl.u32 %v931, 7
        %v933 = vsub.s32 1, %v932
        %v934 = vrot.slane %v925, %v933
        %v937 = vmul.f32 %v924, %v930
        %v938 = vmul.f32 %v923, %v934
        %v941 = vrot.slane %v937, 4
        %v942 = vrot.slane %v938, 4
        %945 = vst [vmem:[#allocation2] sm:$0xf0] %v941
        %946 = vst [vmem:[#allocation2 + $0x8] sm:$0xf0] %v942
        %947 = vrot.lane.b32.xlu0 %v893, 15
        %v948 = vpop.permute.xlu0 %947
        %949 = vrot.lane.b32.xlu0 %v894, 15
        %v950 = vpop.permute.xlu0 %949
        %v951 = vsel %vm312, %v948, %v950
        %v952 = vsel %vm312, %v950, %v948
        %v953 = vld [vmem:[%s315] ss:$8 sm:$0x3]
        %v955 = vlaneseq
        %v956 = vshrl.u32 %v955, 7
        %v957 = vsub.s32 0, %v956
        %v958 = vrot.slane %v953, %v957
        %v959 = vlaneseq
        %v960 = vshrl.u32 %v959, 7
        %v961 = vsub.s32 1, %v960
        %v962 = vrot.slane %v953, %v961
        %v965 = vmul.f32 %v952, %v958
        %v966 = vmul.f32 %v951, %v962
        %967 = vst [vmem:[#allocation2 + $0x10] sm:$0xf] %v965
        %968 = vst [vmem:[#allocation2 + $0x18] sm:$0xf] %v966
        %969 = vrot.lane.b32.xlu0 %v893, 1
        %v970 = vpop.permute.xlu0 %969
        %971 = vrot.lane.b32.xlu0 %v894, 1
        %v972 = vpop.permute.xlu0 %971
        %v973 = vsel %vm336, %v970, %v972
        %v974 = vsel %vm336, %v972, %v970
        %v975 = vld [vmem:[%s339] ss:$8 sm:$0x3]
        %v977 = vlaneseq
        %v978 = vshrl.u32 %v977, 7
        %v979 = vsub.s32 0, %v978
        %v980 = vrot.slane %v975, %v979
        %v981 = vlaneseq
        %v982 = vshrl.u32 %v981, 7
        %v983 = vsub.s32 1, %v982
        %v984 = vrot.slane %v975, %v983
        %v987 = vmul.f32 %v974, %v980
        %v988 = vmul.f32 %v973, %v984
        %v991 = vrot.slane %v987, 4
        %v992 = vrot.slane %v988, 4
        %995 = vst [vmem:[#allocation2 + $0x10] sm:$0xf0] %v991
        %996 = vst [vmem:[#allocation2 + $0x18] sm:$0xf0] %v992
        %997 = vst [vmem:[#allocation2 + $0x20] sm:$0xf] %v893
        %998 = vst [vmem:[#allocation2 + $0x28] sm:$0xf] %v894
        %999 = vrot.lane.b32.xlu0 %v893, 127
        %v1000 = vpop.permute.xlu0 %999
        %1001 = vrot.lane.b32.xlu0 %v894, 127
        %v1002 = vpop.permute.xlu0 %1001
        %v1003 = vsel %vm368, %v1000, %v1002
        %v1004 = vsel %vm368, %v1002, %v1000
        %v1005 = vld [vmem:[%s371] ss:$8 sm:$0x3]
        %v1007 = vlaneseq
        %v1008 = vshrl.u32 %v1007, 7
        %v1009 = vsub.s32 0, %v1008
        %v1010 = vrot.slane %v1005, %v1009
        %v1011 = vlaneseq
        %v1012 = vshrl.u32 %v1011, 7
        %v1013 = vsub.s32 1, %v1012
        %v1014 = vrot.slane %v1005, %v1013
        %v1017 = vmul.f32 %v1003, %v1010
        %v1018 = vmul.f32 %v1004, %v1014
        %v1021 = vrot.slane %v1017, 4
        %v1022 = vrot.slane %v1018, 4
        %1025 = vst [vmem:[#allocation2 + $0x20] sm:$0xf0] %v1021
        %1026 = vst [vmem:[#allocation2 + $0x28] sm:$0xf0] %v1022
        %1027 = vrot.lane.b32.xlu0 %v893, 113
        %v1028 = vpop.permute.xlu0 %1027
        %1029 = vrot.lane.b32.xlu0 %v894, 113
        %v1030 = vpop.permute.xlu0 %1029
        %v1031 = vsel %vm398, %v1028, %v1030
        %v1032 = vsel %vm398, %v1030, %v1028
        %v1033 = vld [vmem:[%s401] ss:$8 sm:$0x3]
        %v1035 = vlaneseq
        %v1036 = vshrl.u32 %v1035, 7
        %v1037 = vsub.s32 0, %v1036
        %v1038 = vrot.slane %v1033, %v1037
        %v1039 = vlaneseq
        %v1040 = vshrl.u32 %v1039, 7
        %v1041 = vsub.s32 1, %v1040
        %v1042 = vrot.slane %v1033, %v1041
        %v1045 = vmul.f32 %v1031, %v1038
        %v1046 = vmul.f32 %v1032, %v1042
        %1047 = vst [vmem:[#allocation2 + $0x30] sm:$0xf] %v1045
        %1048 = vst [vmem:[#allocation2 + $0x38] sm:$0xf] %v1046
        %1049 = vrot.lane.b32.xlu0 %v893, 112
        %v1050 = vpop.permute.xlu0 %1049
        %1051 = vrot.lane.b32.xlu0 %v894, 112
        %v1052 = vpop.permute.xlu0 %1051
        %v1053 = vsel %vm422, %v1050, %v1052
        %v1054 = vsel %vm422, %v1052, %v1050
        %v1055 = vld [vmem:[%s425] ss:$8 sm:$0x3]
        %v1057 = vlaneseq
        %v1058 = vshrl.u32 %v1057, 7
        %v1059 = vsub.s32 0, %v1058
        %v1060 = vrot.slane %v1055, %v1059
        %v1061 = vlaneseq
        %v1062 = vshrl.u32 %v1061, 7
        %v1063 = vsub.s32 1, %v1062
        %v1064 = vrot.slane %v1055, %v1063
        %v1067 = vmul.f32 %v1053, %v1060
        %v1068 = vmul.f32 %v1054, %v1064
        %v1071 = vrot.slane %v1067, 4
        %v1072 = vrot.slane %v1068, 4
        %1075 = vst [vmem:[#allocation2 + $0x30] sm:$0xf0] %v1071
        %1076 = vst [vmem:[#allocation2 + $0x38] sm:$0xf0] %v1072
        %1077 = vrot.lane.b32.xlu0 %v893, 111
        %v1078 = vpop.permute.xlu0 %1077
        %1079 = vrot.lane.b32.xlu0 %v894, 111
        %v1080 = vpop.permute.xlu0 %1079
        %v1081 = vsel %vm452, %v1078, %v1080
        %v1082 = vsel %vm452, %v1080, %v1078
        %v1083 = vld [vmem:[%s455] ss:$8 sm:$0x3]
        %v1085 = vlaneseq
        %v1086 = vshrl.u32 %v1085, 7
        %v1087 = vsub.s32 0, %v1086
        %v1088 = vrot.slane %v1083, %v1087
        %v1089 = vlaneseq
        %v1090 = vshrl.u32 %v1089, 7
        %v1091 = vsub.s32 1, %v1090
        %v1092 = vrot.slane %v1083, %v1091
        %v1095 = vmul.f32 %v1081, %v1088
        %v1096 = vmul.f32 %v1082, %v1092
        %1097 = vst [vmem:[#allocation2 + $0x40] sm:$0xf] %v1095
        %1098 = vst [vmem:[#allocation2 + $0x48] sm:$0xf] %v1096
        %v1099 = vld [vmem:[#allocation9] sm:$0xff]
        %v1100 = vld [vmem:[#allocation2] sm:$0xff]
        %v1101 = vld [vmem:[#allocation2 + $0x8] sm:$0xff]
        %v1102 = vld [vmem:[#allocation2 + $0x10] sm:$0xff]
        %v1103 = vld [vmem:[#allocation2 + $0x18] sm:$0xff]
        %v1104 = vld [vmem:[#allocation2 + $0x20] sm:$0xff]
        %v1105 = vld [vmem:[#allocation2 + $0x28] sm:$0xff]
        %v1106 = vld [vmem:[#allocation2 + $0x30] sm:$0xff]
        %v1107 = vld [vmem:[#allocation2 + $0x38] sm:$0xff]
        %v1108 = vld [vmem:[#allocation2 + $0x40] sm:$0x1f]
        %v1109 = vld [vmem:[#allocation2 + $0x48] sm:$0x1f]
        %v1111 = vsel %vm483, %v1099, 0
        %v1114 = vsel %vm487, %v1108, 0
        %v1117 = vsel %vm487, %v1109, 0
        %1119 = vmatprep.subr.mxu0 0.0
        %1120 = vmatpush1.msra.mxu0 0.0
        %1121 = vmatprep.subr.mxu0 0.0
        %1122 = vmatpush1.msra.mxu0 0.0
        %1123 = vmatprep.subr.mxu0 0.0
        %1124 = vmatpush1.msra.mxu0 0.0
        %1125 = vmatprep.subr.mxu0 0.0
        %1126 = vmatpush1.msra.mxu0 0.0
        %1127 = vmatprep.subr.mxu0 0.0
        %1128 = vmatpush1.msra.mxu0 0.0
        %1129 = vmatprep.subr.mxu0 0.0
        %1130 = vmatpush1.msra.mxu0 0.0
        %1131 = vmatprep.subr.mxu0 0.0
        %1132 = vmatpush1.msra.mxu0 0.0
        %1133 = vmatprep.subr.mxu0 0.0
        %1134 = vmatpush1.msra.mxu0 0.0
        %1135 = vmatprep.subr.mxu0 0.0
        %1136 = vmatpush1.msra.mxu0 0.0
        %1137 = vmatprep.subr.mxu0 0.0
        %1138 = vmatpush1.msra.mxu0 0.0
        %1139 = vmatprep.subr.mxu0 0.0
        %1140 = vmatpush1.msra.mxu0 0.0
        %1141 = vmatprep.subr.mxu0 %v1117
        %1142 = vmatpush1.msra.mxu0 %v1114
        %1143 = vmatprep.subr.mxu0 %v1107
        %1144 = vmatpush1.msra.mxu0 %v1106
        %1145 = vmatprep.subr.mxu0 %v1105
        %1146 = vmatpush1.msra.mxu0 %v1104
        %1147 = vmatprep.subr.mxu0 %v1103
        %1148 = vmatpush1.msra.mxu0 %v1102
        %1149 = vmatprep.subr.mxu0 %v1101
        %1150 = vmatpush1.msra.mxu0 %v1100
        %1151 = vmatprep.subr.mxu0 0.0
        %1152 = vmatpush2.msra.mxu0 0.0
        %1153 = vmatprep.subr.mxu0 0.0
        %1154 = vmatpush2.msra.mxu0 0.0
        %1155 = vmatprep.subr.mxu0 0.0
        %1156 = vmatpush2.msra.mxu0 0.0
        %1157 = vmatprep.subr.mxu0 0.0
        %1158 = vmatpush2.msra.mxu0 0.0
        %1159 = vmatprep.subr.mxu0 0.0
        %1160 = vmatpush2.msra.mxu0 0.0
        %1161 = vmatprep.subr.mxu0 0.0
        %1162 = vmatpush2.msra.mxu0 0.0
        %1163 = vmatprep.subr.mxu0 0.0
        %1164 = vmatpush2.msra.mxu0 0.0
        %1165 = vmatprep.subr.mxu0 0.0
        %1166 = vmatpush2.msra.mxu0 0.0
        %1167 = vmatprep.subr.mxu0 0.0
        %1168 = vmatpush2.msra.mxu0 0.0
        %1169 = vmatprep.subr.mxu0 0.0
        %1170 = vmatpush2.msra.mxu0 0.0
        %1171 = vmatprep.subr.mxu0 0.0
        %1172 = vmatpush2.msra.mxu0 0.0
        %1173 = vmatprep.subr.mxu0 0.0
        %1174 = vmatpush2.msra.mxu0 0.0
        %1175 = vmatprep.subr.mxu0 0.0
        %1176 = vmatpush2.msra.mxu0 0.0
        %1177 = vmatprep.subr.mxu0 0.0
        %1178 = vmatpush2.msra.mxu0 0.0
        %1179 = vmatprep.subr.mxu0 0.0
        %1180 = vmatpush2.msra.mxu0 0.0
        %1181 = vmatprep.subr.mxu0 0.0
        %1182 = vmatpush2.msra.mxu0 0.0
        %1183 = vmatprep.mubr.f32.mxu0 0.0
        %1184 = vmatmul.mubr.f32.gmra.mxu0 %v1111
        %v1185 = vpop.f32.mrf.mxu0
        %v1186 = vadd.f32 0.0, %v1185
        %v1187 = vpop.f32.mrf.mxu0
        %v1188 = vadd.f32 0.0, %v1187
        %1189 = vdwg.mxu0
        %v1190 = vadd.f32 %v1186, %v1188
        %1191 = vadd.xlane.f32.xlu0 %v1190
        %v1192 = vpop.xlane.xlu0 %1191
        %v1193 = vmul.f32 %v1192, 0.00390625
        %v1194 = vsub.f32 %v1186, %v1193
        %v1195 = vsub.f32 %v1188, %v1193
        %v1196 = vmul.f32 %v1194, %v1194
        %v1197 = vmul.f32 %v1195, %v1195
        %v1198 = vadd.f32 %v1196, %v1197
        %1199 = vadd.xlane.f32.xlu0 %v1198
        %v1200 = vpop.xlane.xlu0 %1199
        %v1201 = vmul.f32 %v1200, 0.00390625
        %v1202 = vadd.f32 %v1201, 1e-05
        %v1203 = vrsqrt.pop %v1202
        %v1204 = vmul.f32 %v1194, %v1203
        %v1205 = vmul.f32 %v1195, %v1203
        %v1206 = vtanh.pop %v1204
        %v1207 = vtanh.pop %v1205
        %1208 = vrot.lane.b32.xlu0 %v1206, 17
        %v1209 = vpop.permute.xlu0 %1208
        %1210 = vrot.lane.b32.xlu0 %v1207, 17
        %v1211 = vpop.permute.xlu0 %1210
        %v1212 = vsel %vm259, %v1209, %v1211
        %v1213 = vsel %vm259, %v1211, %v1209
        %v1214 = vld [vmem:[#allocation7] ss:$8 sm:$0x3]
        %v1216 = vlaneseq
        %v1217 = vshrl.u32 %v1216, 7
        %v1218 = vsub.s32 0, %v1217
        %v1219 = vrot.slane %v1214, %v1218
        %v1220 = vlaneseq
        %v1221 = vshrl.u32 %v1220, 7
        %v1222 = vsub.s32 1, %v1221
        %v1223 = vrot.slane %v1214, %v1222
        %v1226 = vmul.f32 %v1213, %v1219
        %v1227 = vmul.f32 %v1212, %v1223
        %1228 = vst [vmem:[#allocation3] sm:$0xff] %v1226
        %1229 = vst [vmem:[#allocation3 + $0x8] sm:$0xff] %v1227
        %1230 = vrot.lane.b32.xlu0 %v1206, 16
        %v1231 = vpop.permute.xlu0 %1230
        %1232 = vrot.lane.b32.xlu0 %v1207, 16
        %v1233 = vpop.permute.xlu0 %1232
        %v1234 = vsel %vm282, %v1231, %v1233
        %v1235 = vsel %vm282, %v1233, %v1231
        %v1236 = vld [vmem:[%s285] ss:$8 sm:$0x3]
        %v1238 = vlaneseq
        %v1239 = vshrl.u32 %v1238, 7
        %v1240 = vsub.s32 0, %v1239
        %v1241 = vrot.slane %v1236, %v1240
        %v1242 = vlaneseq
        %v1243 = vshrl.u32 %v1242, 7
        %v1244 = vsub.s32 1, %v1243
        %v1245 = vrot.slane %v1236, %v1244
        %v1248 = vmul.f32 %v1235, %v1241
        %v1249 = vmul.f32 %v1234, %v1245
        %1250 = vst [vmem:[#allocation3 + $0x10] sm:$0xff] %v1248
        %1251 = vst [vmem:[#allocation3 + $0x18] sm:$0xff] %v1249
        %1252 = vrot.lane.b32.xlu0 %v1206, 15
        %v1253 = vpop.permute.xlu0 %1252
        %1254 = vrot.lane.b32.xlu0 %v1207, 15
        %v1255 = vpop.permute.xlu0 %1254
        %v1256 = vsel %vm312, %v1253, %v1255
        %v1257 = vsel %vm312, %v1255, %v1253
        %v1258 = vld [vmem:[%s315] ss:$8 sm:$0x3]
        %v1260 = vlaneseq
        %v1261 = vshrl.u32 %v1260, 7
        %v1262 = vsub.s32 0, %v1261
        %v1263 = vrot.slane %v1258, %v1262
        %v1264 = vlaneseq
        %v1265 = vshrl.u32 %v1264, 7
        %v1266 = vsub.s32 1, %v1265
        %v1267 = vrot.slane %v1258, %v1266
        %v1270 = vmul.f32 %v1257, %v1263
        %v1271 = vmul.f32 %v1256, %v1267
        %1272 = vst [vmem:[#allocation3 + $0x20] sm:$0xff] %v1270
        %1273 = vst [vmem:[#allocation3 + $0x28] sm:$0xff] %v1271
        %1274 = vrot.lane.b32.xlu0 %v1206, 1
        %v1275 = vpop.permute.xlu0 %1274
        %1276 = vrot.lane.b32.xlu0 %v1207, 1
        %v1277 = vpop.permute.xlu0 %1276
        %v1278 = vsel %vm336, %v1275, %v1277
        %v1279 = vsel %vm336, %v1277, %v1275
        %v1280 = vld [vmem:[%s339] ss:$8 sm:$0x3]
        %v1282 = vlaneseq
        %v1283 = vshrl.u32 %v1282, 7
        %v1284 = vsub.s32 0, %v1283
        %v1285 = vrot.slane %v1280, %v1284
        %v1286 = vlaneseq
        %v1287 = vshrl.u32 %v1286, 7
        %v1288 = vsub.s32 1, %v1287
        %v1289 = vrot.slane %v1280, %v1288
        %v1292 = vmul.f32 %v1279, %v1285
        %v1293 = vmul.f32 %v1278, %v1289
        %1294 = vst [vmem:[#allocation3 + $0x30] sm:$0xff] %v1292
        %1295 = vst [vmem:[#allocation3 + $0x38] sm:$0xff] %v1293
        %1296 = vst [vmem:[#allocation3 + $0x40] sm:$0xff] %v1206
        %1297 = vst [vmem:[#allocation3 + $0x48] sm:$0xff] %v1207
        %1298 = vrot.lane.b32.xlu0 %v1206, 127
        %v1299 = vpop.permute.xlu0 %1298
        %1300 = vrot.lane.b32.xlu0 %v1207, 127
        %v1301 = vpop.permute.xlu0 %1300
        %v1302 = vsel %vm368, %v1299, %v1301
        %v1303 = vsel %vm368, %v1301, %v1299
        %v1304 = vld [vmem:[%s371] ss:$8 sm:$0x3]
        %v1306 = vlaneseq
        %v1307 = vshrl.u32 %v1306, 7
        %v1308 = vsub.s32 0, %v1307
        %v1309 = vrot.slane %v1304, %v1308
        %v1310 = vlaneseq
        %v1311 = vshrl.u32 %v1310, 7
        %v1312 = vsub.s32 1, %v1311
        %v1313 = vrot.slane %v1304, %v1312
        %v1316 = vmul.f32 %v1302, %v1309
        %v1317 = vmul.f32 %v1303, %v1313
        %1318 = vst [vmem:[#allocation3 + $0x50] sm:$0xff] %v1316
        %1319 = vst [vmem:[#allocation3 + $0x58] sm:$0xff] %v1317
        %1320 = vrot.lane.b32.xlu0 %v1206, 113
        %v1321 = vpop.permute.xlu0 %1320
        %1322 = vrot.lane.b32.xlu0 %v1207, 113
        %v1323 = vpop.permute.xlu0 %1322
        %v1324 = vsel %vm398, %v1321, %v1323
        %v1325 = vsel %vm398, %v1323, %v1321
        %v1326 = vld [vmem:[%s401] ss:$8 sm:$0x3]
        %v1328 = vlaneseq
        %v1329 = vshrl.u32 %v1328, 7
        %v1330 = vsub.s32 0, %v1329
        %v1331 = vrot.slane %v1326, %v1330
        %v1332 = vlaneseq
        %v1333 = vshrl.u32 %v1332, 7
        %v1334 = vsub.s32 1, %v1333
        %v1335 = vrot.slane %v1326, %v1334
        %v1338 = vmul.f32 %v1324, %v1331
        %v1339 = vmul.f32 %v1325, %v1335
        %1340 = vst [vmem:[#allocation3 + $0x60] sm:$0xff] %v1338
        %1341 = vst [vmem:[#allocation3 + $0x68] sm:$0xff] %v1339
        %1342 = vrot.lane.b32.xlu0 %v1206, 112
        %v1343 = vpop.permute.xlu0 %1342
        %1344 = vrot.lane.b32.xlu0 %v1207, 112
        %v1345 = vpop.permute.xlu0 %1344
        %v1346 = vsel %vm422, %v1343, %v1345
        %v1347 = vsel %vm422, %v1345, %v1343
        %v1348 = vld [vmem:[%s425] ss:$8 sm:$0x3]
        %v1350 = vlaneseq
        %v1351 = vshrl.u32 %v1350, 7
        %v1352 = vsub.s32 0, %v1351
        %v1353 = vrot.slane %v1348, %v1352
        %v1354 = vlaneseq
        %v1355 = vshrl.u32 %v1354, 7
        %v1356 = vsub.s32 1, %v1355
        %v1357 = vrot.slane %v1348, %v1356
        %v1360 = vmul.f32 %v1346, %v1353
        %v1361 = vmul.f32 %v1347, %v1357
        %1362 = vst [vmem:[#allocation3 + $0x70] sm:$0xff] %v1360
        %1363 = vst [vmem:[#allocation3 + $0x78] sm:$0xff] %v1361
        %1364 = vrot.lane.b32.xlu0 %v1206, 111
        %v1365 = vpop.permute.xlu0 %1364
        %1366 = vrot.lane.b32.xlu0 %v1207, 111
        %v1367 = vpop.permute.xlu0 %1366
        %v1368 = vsel %vm452, %v1365, %v1367
        %v1369 = vsel %vm452, %v1367, %v1365
        %v1370 = vld [vmem:[%s455] ss:$8 sm:$0x3]
        %v1372 = vlaneseq
        %v1373 = vshrl.u32 %v1372, 7
        %v1374 = vsub.s32 0, %v1373
        %v1375 = vrot.slane %v1370, %v1374
        %v1376 = vlaneseq
        %v1377 = vshrl.u32 %v1376, 7
        %v1378 = vsub.s32 1, %v1377
        %v1379 = vrot.slane %v1370, %v1378
        %v1382 = vmul.f32 %v1368, %v1375
        %v1383 = vmul.f32 %v1369, %v1379
        %1384 = vst [vmem:[#allocation3 + $0x80] sm:$0xff] %v1382
        %1385 = vst [vmem:[#allocation3 + $0x88] sm:$0xff] %v1383
        %v1386 = vld [vmem:[%s3] sm:$0xf]
        %v1387 = vld [vmem:[#allocation3] sm:$0xff]
        %v1388 = vld [vmem:[#allocation3 + $0x8] sm:$0xff]
        %v1389 = vld [vmem:[#allocation3 + $0x10] sm:$0xff]
        %v1390 = vld [vmem:[#allocation3 + $0x18] sm:$0xff]
        %v1391 = vld [vmem:[#allocation3 + $0x20] sm:$0xff]
        %v1392 = vld [vmem:[#allocation3 + $0x28] sm:$0xff]
        %v1393 = vld [vmem:[#allocation3 + $0x30] sm:$0xff]
        %v1394 = vld [vmem:[#allocation3 + $0x38] sm:$0xff]
        %v1395 = vld [vmem:[#allocation3 + $0x40] sm:$0xff]
        %v1396 = vld [vmem:[#allocation3 + $0x48] sm:$0xff]
        %v1397 = vld [vmem:[#allocation3 + $0x50] sm:$0xff]
        %v1398 = vld [vmem:[#allocation3 + $0x58] sm:$0xff]
        %v1399 = vld [vmem:[#allocation3 + $0x60] sm:$0xff]
        %v1400 = vld [vmem:[#allocation3 + $0x68] sm:$0xff]
        %v1401 = vld [vmem:[#allocation3 + $0x70] sm:$0xff]
        %v1402 = vld [vmem:[#allocation3 + $0x78] sm:$0xff]
        %v1403 = vld [vmem:[#allocation3 + $0x80] sm:$0xff]
        %v1404 = vld [vmem:[#allocation3 + $0x88] sm:$0xff]
        %v1405 = vld [vmem:[#allocation3 + $0x90] sm:$0x1]
        %v1406 = vld [vmem:[#allocation3 + $0x98] sm:$0x1]
        %v1408 = vsel %vm782, %v1386, 0
        %v1411 = vsel %vm786, %v1405, 0
        %v1414 = vsel %vm786, %v1406, 0
        %1416 = vmatprep.subr.mxu0 0.0
        %1417 = vmatpush1.msra.mxu0 0.0
        %1418 = vmatprep.subr.mxu0 0.0
        %1419 = vmatpush1.msra.mxu0 0.0
        %1420 = vmatprep.subr.mxu0 0.0
        %1421 = vmatpush1.msra.mxu0 0.0
        %1422 = vmatprep.subr.mxu0 0.0
        %1423 = vmatpush1.msra.mxu0 0.0
        %1424 = vmatprep.subr.mxu0 0.0
        %1425 = vmatpush1.msra.mxu0 0.0
        %1426 = vmatprep.subr.mxu0 0.0
        %1427 = vmatpush1.msra.mxu0 0.0
        %1428 = vmatprep.subr.mxu0 %v1414
        %1429 = vmatpush1.msra.mxu0 %v1411
        %1430 = vmatprep.subr.mxu0 %v1404
        %1431 = vmatpush1.msra.mxu0 %v1403
        %1432 = vmatprep.subr.mxu0 %v1402
        %1433 = vmatpush1.msra.mxu0 %v1401
        %1434 = vmatprep.subr.mxu0 %v1400
        %1435 = vmatpush1.msra.mxu0 %v1399
        %1436 = vmatprep.subr.mxu0 %v1398
        %1437 = vmatpush1.msra.mxu0 %v1397
        %1438 = vmatprep.subr.mxu0 %v1396
        %1439 = vmatpush1.msra.mxu0 %v1395
        %1440 = vmatprep.subr.mxu0 %v1394
        %1441 = vmatpush1.msra.mxu0 %v1393
        %1442 = vmatprep.subr.mxu0 %v1392
        %1443 = vmatpush1.msra.mxu0 %v1391
        %1444 = vmatprep.subr.mxu0 %v1390
        %1445 = vmatpush1.msra.mxu0 %v1389
        %1446 = vmatprep.subr.mxu0 %v1388
        %1447 = vmatpush1.msra.mxu0 %v1387
        %1448 = vmatprep.subr.mxu0 0.0
        %1449 = vmatpush2.msra.mxu0 0.0
        %1450 = vmatprep.subr.mxu0 0.0
        %1451 = vmatpush2.msra.mxu0 0.0
        %1452 = vmatprep.subr.mxu0 0.0
        %1453 = vmatpush2.msra.mxu0 0.0
        %1454 = vmatprep.subr.mxu0 0.0
        %1455 = vmatpush2.msra.mxu0 0.0
        %1456 = vmatprep.subr.mxu0 0.0
        %1457 = vmatpush2.msra.mxu0 0.0
        %1458 = vmatprep.subr.mxu0 0.0
        %1459 = vmatpush2.msra.mxu0 0.0
        %1460 = vmatprep.subr.mxu0 0.0
        %1461 = vmatpush2.msra.mxu0 0.0
        %1462 = vmatprep.subr.mxu0 0.0
        %1463 = vmatpush2.msra.mxu0 0.0
        %1464 = vmatprep.subr.mxu0 0.0
        %1465 = vmatpush2.msra.mxu0 0.0
        %1466 = vmatprep.subr.mxu0 0.0
        %1467 = vmatpush2.msra.mxu0 0.0
        %1468 = vmatprep.subr.mxu0 0.0
        %1469 = vmatpush2.msra.mxu0 0.0
        %1470 = vmatprep.subr.mxu0 0.0
        %1471 = vmatpush2.msra.mxu0 0.0
        %1472 = vmatprep.subr.mxu0 0.0
        %1473 = vmatpush2.msra.mxu0 0.0
        %1474 = vmatprep.subr.mxu0 0.0
        %1475 = vmatpush2.msra.mxu0 0.0
        %1476 = vmatprep.subr.mxu0 0.0
        %1477 = vmatpush2.msra.mxu0 0.0
        %1478 = vmatprep.subr.mxu0 0.0
        %1479 = vmatpush2.msra.mxu0 0.0
        %1480 = vmatprep.mubr.f32.mxu0 0.0
        %1481 = vmatmul.mubr.f32.gmra.mxu0 %v1408
        %v1482 = vpop.f32.mrf.mxu0
        %v1483 = vadd.f32 0.0, %v1482
        %v1484 = vpop.f32.mrf.mxu0
        %v1485 = vadd.f32 0.0, %v1484
        %1486 = vdwg.mxu0
        %v1487 = vsel %vm864, %v1483, 0.0
        %v1488 = vsel %vm864, %v1485, 0.0
        %v1489 = vadd.f32 %v1487, %v1488
        %1490 = vadd.xlane.f32.xlu0 %v1489
        %v1491 = vpop.xlane.xlu0 %1490
        %v1492 = vmul.f32 %v1491, 0.00390625
        %v1493 = vsub.f32 %v1483, %v1492
        %v1494 = vsub.f32 %v1485, %v1492
        %v1495 = vmul.f32 %v1493, %v1493
        %v1496 = vmul.f32 %v1494, %v1494
        %v1497 = vsel %vm864, %v1495, 0.0
        %v1498 = vsel %vm864, %v1496, 0.0
        %v1499 = vadd.f32 %v1497, %v1498
        %1500 = vadd.xlane.f32.xlu0 %v1499
        %v1501 = vpop.xlane.xlu0 %1500
        %v1502 = vmul.f32 %v1501, 0.00390625
        %v1503 = vadd.f32 %v1502, 1e-05
        %v1504 = vrsqrt.pop %v1503
        %v1505 = vmul.f32 %v1493, %v1504
        %v1506 = vmul.f32 %v1494, %v1504
        %v1507 = vtanh.pop %v1505
        %v1508 = vtanh.pop %v1506
        %v1511 = vrot.slane %v1507, 4
        %v1512 = vrot.slane %v1508, 4
        %1515 = vst [vmem:[%s240] sm:$0xf0] %v1511
        %1516 = vst [vmem:[%s240 + $0x8] sm:$0xf0] %v1512
        %s1517 = sand.u32 %s119, 1
        %s1518 = scalar_lea.sflag [#allocation6], %s1517
        %s1519 = sand.u32 %s119, 1
        %s1520 = smul.addr %s1519, 16
        %s1521 = scalar_lea.vmem [#allocation10], %s1520
        // Predicated region
        $region49: #{tpu_custom_call.1} parent=35 // pred_check
          %p1522 = pneg %p129
        $region50: #{tpu_custom_call.1} parent=35 // pred_check_branch
          %1524 = sbr.rel (%p1522) target = $region52
        $region51: #{tpu_custom_call.1} parent=35 // pred_region
          %s1526 = ssub.s32 256, 256
          %1527 = vsyncadd %s1518, %s1526
          %s1528 = smul.addr %s22, 2
          %s1529 = smul.addr %s1528, 128
          %s1530 = scalar_lea.hbm %s4, %s1529
          %s1532 = sshll.u32 %s1521, 4
          %s1533 = int_to_ptr.vmem [resolvable:$true] %s1532
          %1535 = dma.vmem_to_hbm [thread:$0]  %s1533, 256, %s1530, %s1518
        $region52: #{tpu_custom_call.1} parent=35 // pred_fallthru
          _
      $region36: #{tpu_custom_call.1} parent=5 // pred_fallthru
        _
      %p1536 = scmp.le.s32.totalorder 2, %s17
      // Predicated region
      $region53: #{tpu_custom_call.1} parent=5 // pred_check
        %p1537 = pneg %p1536
      $region54: #{tpu_custom_call.1} parent=5 // pred_check_branch
        %1539 = sbr.rel (%p1537) target = $region56
      $region55: #{tpu_custom_call.1} parent=5 // pred_region
        %s1540 = ssub.s32 %s17, 2
        // Predicated region
        $region57: #{tpu_custom_call.1} parent=55 // pred_check
          %p1541 = pneg %p135
        $region58: #{tpu_custom_call.1} parent=55 // pred_check_branch
          %1543 = sbr.rel (%p1541) target = $region60
        $region59: #{tpu_custom_call.1} parent=55 // pred_region
          %s1544 = sand.u32 %s120, 1
          %s1545 = scalar_lea.sflag [#allocation6], %s1544
          %s1546 = sand.u32 %s120, 1
          %s1547 = smul.addr %s1546, 16
          %s1548 = scalar_lea.vmem [#allocation10], %s1547
          %1549 = dma.done %s1545, 256
        $region60: #{tpu_custom_call.1} parent=55 // pred_fallthru
          _
      $region56: #{tpu_custom_call.1} parent=5 // pred_fallthru
        _
    $region6: #{tpu_custom_call.1} parent=1 // loop_footer
      %s21 = sadd.s32 1, %s17
    $region7: #{tpu_custom_call.1} parent=1 // loop_footer_branch
      %16 = sbr.rel target = $region3
    $region8: #{tpu_custom_call.1} parent=1 // loop_exit
      _
    %1550 = vsyncpa [#allocation5], 1
    %s1551 = scalar_lea.sflag [#allocation5], 1
    %1552 = vsyncpa %s1551, 1
    %1553 = vsyncpa [#allocation8], 1
    %1554 = vsyncpa [#allocation6], 1
    %s1555 = scalar_lea.sflag [#allocation6], 1
    %1556 = vsyncpa %s1555, 1

</llo_original>
